<compile_context>
chip_gen: v7x
topology: tpu7x:2x2x1
jax: 0.10.0
libtpu: 0.0.40
codegen_flags: <defaults>
</compile_context>

<pallas_src>
import functools

import jax
import jax.numpy as jnp
from jax.experimental import pallas as pl
from jax.experimental.pallas import tpu as pltpu

INPUT_SIZE = 128
HIDDEN_SIZE = 128


def _round_up(x, m):
    return (x + m - 1) // m * m


@functools.lru_cache(maxsize=None)
def _vmem_bytes():
    """Physical VMEM per core; conservative v7x default if the query fails."""
    try:
        info = pltpu.get_tpu_info()
        for attr in ("vmem_capacity_bytes", "vmem_size_bytes", "vmem_bytes"):
            v = getattr(info, attr, None)
            if isinstance(v, int) and v > 0:
                return v
    except Exception:
        pass
    return 64 * 1024 * 1024


@functools.lru_cache(maxsize=None)
def _tensorcores_per_chip():
    """Best-effort TensorCore count (v7x has 2); default 1 if unknown."""
    try:
        info = pltpu.get_tpu_info()
        for attr in ("num_cores", "num_tensorcores", "tensorcore_count",
                     "cores_per_chip", "num_tensor_cores"):
            v = getattr(info, attr, None)
            if isinstance(v, int) and v > 0:
                return v
    except Exception:
        pass
    try:
        dev = jax.devices()[0]
        for attr in ("num_cores", "core_count"):
            v = getattr(dev, attr, None)
            if isinstance(v, int) and v > 0:
                return v
    except Exception:
        pass
    return 1


def _pick_time_chunk(T, Bb, vmem_bytes, max_chunk=512):
    """VMEM-budget-aware timesteps per grid step (per-generation sizing)."""
    # Per-timestep resident VMEM: double-buffered bf16 x block + f32 gx scratch.
    per_step = Bb * (2 * INPUT_SIZE * 2 + 4 * HIDDEN_SIZE * 4)
    budget = max(vmem_bytes // 4, 4 << 20)       # headroom for weights/pipeline
    tt = max(1, min(T, max_chunk, budget // per_step))
    if tt >= 8:
        tt -= tt % 8                             # sublane-aligned chunk size
    return tt


# ---------------------------------------------------------------------------
# Fused kernel: per (batch_shard, time_chunk) grid step
#   1) chunk input projection (one big bf16 MXU matmul) -> VMEM scratch
#   2) partially-unrolled recurrence over the chunk's timesteps
# ---------------------------------------------------------------------------
def lstm_fused_kernel(x_ref, wih_ref, whh_ref, b_ref, out_ref, gx_scr, c_scr,
                      *, seq_len, needs_mask):
    # x_ref  : (Tt*Bb, I) bf16  time-major rows for this (shard, chunk)
    # wih_ref: (I, 4H)    bf16  gate-permuted [i,f,o|g], transposed
    # whh_ref: (H, 4H)    bf16
    # b_ref  : (1, 4H)    f32   b_ih + b_hh (gate-permuted)
    # out_ref: (Bb, H)    f32   running h (constant index in t => VMEM-resident)
    # gx_scr : (Tt*Bb,4H) f32   per-chunk input-projection scratch
    # c_scr  : (Bb, H)    f32   running c
    #
    # NOTE (state-carry invariant): time must be the INNERMOST grid axis and
    # out_ref's index map must be constant in t, otherwise the h/c carry across
    # time chunks breaks.
    t_chunk = pl.program_id(1)

    @pl.when(t_chunk == 0)
    def _():
        out_ref[...] = jnp.zeros_like(out_ref)   # h0 = 0
        c_scr[...] = jnp.zeros_like(c_scr)       # c0 = 0

    Bb, H = out_ref.shape
    Tt = x_ref.shape[0] // Bb

    # --- fused input projection for the whole chunk (one big MXU matmul) ---
    gx_scr[...] = jnp.dot(x_ref[...], wih_ref[...],
                          preferred_element_type=jnp.float32) + b_ref[...]

    whh = whh_ref[...]                           # loop-invariant, hoisted
    base_t = t_chunk * Tt

    def step(s, carry):
        h, c = carry
        row = pl.multiple_of(s * Bb, Bb)         # aligned sublane slice
        gates = gx_scr[pl.ds(row, Bb), :] + jnp.dot(
            h.astype(jnp.bfloat16), whh, preferred_element_type=jnp.float32)
        # Gate order permuted wrapper-side to [i, f, o | g]: one fused sigmoid
        # over 3H lanes instead of three separate EUP calls.
        sig = jax.nn.sigmoid(gates[:, :3 * H])
        i_g = sig[:, 0 * H:1 * H]
        f_g = sig[:, 1 * H:2 * H]
        o_g = sig[:, 2 * H:3 * H]
        g_g = jnp.tanh(gates[:, 3 * H:])
        c_new = f_g * c + i_g * g_g
        h_new = o_g * jnp.tanh(c_new)            # tanh(c) computed once
        if needs_mask:                           # static: only when T was padded
            valid = (base_t + s) < seq_len
            h_new = jnp.where(valid, h_new, h)
            c_new = jnp.where(valid, c_new, c)
        return (h_new, c_new)

    # TODO(synk): hold W_hh resident in the MXU across the chunk with
    # pltpu.matmul_push_rhs / matmul_acc_lhs / matmul_pop (v5e latency item).
    h, c = jax.lax.fori_loop(0, Tt, step, (out_ref[...], c_scr[...]),
                             unroll=min(8, Tt))
    out_ref[...] = h                             # written every chunk (resident)
    c_scr[...] = c


def prepare_lstm_weights(w_ih, w_hh, b_ih, b_hh):
    """One-time weight prep (hoisted out of the per-call jit, per review):
    gate-permute [i,f,g,o] -> [i,f,o,g], transpose, cast MXU operands to bf16."""
    H = HIDDEN_SIZE
    perm = jnp.concatenate([jnp.arange(0, 2 * H),        # i, f
                            jnp.arange(3 * H, 4 * H),    # o
                            jnp.arange(2 * H, 3 * H)])   # g
    wih_t = jnp.transpose(w_ih[perm]).astype(jnp.bfloat16)   # (I, 4H)
    whh_t = jnp.transpose(w_hh[perm]).astype(jnp.bfloat16)   # (H, 4H)
    bias = (b_ih + b_hh)[perm].reshape(1, 4 * H).astype(jnp.float32)
    return wih_t, whh_t, bias


@jax.jit
def lstm_last_hidden(x, wih_t, whh_t, bias):
    """x: (B, T, I) float32; prepared weights. Returns (B, H) == out[:, -1, :]."""
    B, T, I = x.shape
    H = HIDDEN_SIZE
    assert I == INPUT_SIZE

    # ---- static, per-generation sizing ----
    cores = _tensorcores_per_chip()
    vmem = _vmem_bytes()
    Bp = _round_up(max(B, 8), 8)                 # pad batch to sublane multiple
    n_b = 2 if (cores >= 2 and Bp >= 16 and Bp % 16 == 0) else 1
    Bb = Bp // n_b
    Tt = _pick_time_chunk(T, Bb, vmem)
    n_t = (T + Tt - 1) // Tt                     # cdiv: no prime-T degeneration
    Tp = n_t * Tt
    needs_mask = (Tp != T)

    # ---- layout prep: time-major, batch-shard-major, bf16 MXU operand ----
    x_tbi = jnp.transpose(x, (1, 0, 2))          # (T, B, I)
    if Tp != T or Bp != B:
        x_tbi = jnp.pad(x_tbi, ((0, Tp - T), (0, Bp - B), (0, 0)))
    # (n_b, Tp*Bb, I): shard-major so each grid point reads one rectangular,
    # time-major row block (no in-kernel reshapes needed).
    x_sh = (x_tbi.reshape(Tp, n_b, Bb, I).transpose(1, 0, 2, 3)
            .reshape(n_b, Tp * Bb, I).astype(jnp.bfloat16))
    # TODO(synk): for very large inputs fold this transpose/pad into the kernel
    # (pltpu.einshape on batch-first blocks) to avoid the extra HBM round-trip.

    # ---- VMEM estimate -> scoped limit (raise above default when needed) ----
    est = (2 * Tt * Bb * I * 2                   # double-buffered bf16 x block
           + Tt * Bb * 4 * H * 4                 # f32 gates_x scratch
           + 2 * ((I + H) * 4 * H * 2 + 4 * H * 4)   # weights + bias (dbl-buf)
           + 3 * Bb * H * 4)                     # h out (dbl) + c scratch
    vmem_limit = int(min(max(vmem - (8 << 20), 32 << 20),
                         max(32 << 20, est + (16 << 20))))

    kernel = functools.partial(lstm_fused_kernel, seq_len=T,
                               needs_mask=needs_mask)
    # Explicit 2-TC batch split only when the chip actually has >=2 cores.
    batch_sem = pltpu.CORE_PARALLEL if n_b > 1 else pltpu.ARBITRARY

    out_p = pl.pallas_call(
        kernel,
        out_shape=jax.ShapeDtypeStruct((Bp, H), jnp.float32),
        grid_spec=pltpu.PrefetchScalarGridSpec(
            num_scalar_prefetch=0,
            grid=(n_b, n_t),                     # time innermost: state carry!
            in_specs=[
                pl.BlockSpec((None, Tt * Bb, I), lambda b, t: (b, t, 0)),
                pl.BlockSpec((I, 4 * H), lambda b, t: (0, 0)),
                pl.BlockSpec((H, 4 * H), lambda b, t: (0, 0)),
                pl.BlockSpec((1, 4 * H), lambda b, t: (0, 0)),
            ],
            out_specs=pl.BlockSpec((Bb, H), lambda b, t: (b, 0)),
            scratch_shapes=[
                pltpu.VMEM((Tt * Bb, 4 * H), jnp.float32),   # gates_x chunk
                pltpu.VMEM((Bb, H), jnp.float32),            # c state
            ],
        ),
        compiler_params=pltpu.CompilerParams(
            dimension_semantics=(batch_sem, pltpu.ARBITRARY),
            vmem_limit_bytes=vmem_limit,
        ),
    )(x_sh, wih_t, whh_t, bias)

    return out_p[:B]


def lstm_ref(x, w_ih, w_hh, b_ih, b_hh):
    """Pure-JAX f32 reference matching torch.nn.LSTM semantics."""
    B, T, I = x.shape
    H = HIDDEN_SIZE
    h = jnp.zeros((B, H), jnp.float32)
    c = jnp.zeros((B, H), jnp.float32)

    def step(carry, x_t):
        h, c = carry
        gates = x_t @ w_ih.T + h @ w_hh.T + b_ih + b_hh
        i = jax.nn.sigmoid(gates[:, :H])
        f = jax.nn.sigmoid(gates[:, H:2 * H])
        g = jnp.tanh(gates[:, 2 * H:3 * H])
        o = jax.nn.sigmoid(gates[:, 3 * H:])
        c = f * c + i * g
        h = o * jnp.tanh(c)
        return (h, c), h

    (h, _), _ = jax.lax.scan(step, (h, c), jnp.transpose(x, (1, 0, 2)))
    return h


if __name__ == "__main__":
    key = jax.random.PRNGKey(0)
    kx, k1, k2, k3, k4 = jax.random.split(key, 5)

    B, T, I, H = 2, 8, INPUT_SIZE, HIDDEN_SIZE
    x = jax.random.normal(kx, (B, T, I), dtype=jnp.float32)

    # Deterministic init mimicking PyTorch's uniform(-1/sqrt(H), 1/sqrt(H)).
    bound = 1.0 / jnp.sqrt(jnp.float32(H))
    w_ih = jax.random.uniform(k1, (4 * H, I), jnp.float32, -bound, bound)
    w_hh = jax.random.uniform(k2, (4 * H, H), jnp.float32, -bound, bound)
    b_ih = jax.random.uniform(k3, (4 * H,), jnp.float32, -bound, bound)
    b_hh = jax.random.uniform(k4, (4 * H,), jnp.float32, -bound, bound)

    # One-time weight prep (outside the jitted per-call path).
    wih_t, whh_t, bias = jax.block_until_ready(
        prepare_lstm_weights(w_ih, w_hh, b_ih, b_hh))

    out = jax.block_until_ready(lstm_last_hidden(x, wih_t, whh_t, bias))
    ref = jax.block_until_ready(lstm_ref(x, w_ih, w_hh, b_ih, b_hh))

    assert out.shape == (B, H)
    # bf16 MXU operands vs f32 reference -> relaxed tolerance. Re-validate
    # (and tighten/loosen) for much longer T where bf16 h feedback accumulates.
    assert jnp.allclose(out, ref, atol=4e-2, rtol=4e-2), float(
        jnp.max(jnp.abs(out - ref)))

    print("KERNEL_OK")
</pallas_src>

<mosaic_0001>
module attributes {stable_mosaic.version = 11 : i64} {
  func.func @lstm_fused_kernel(%arg0: i32, %arg1: i32, %arg2: memref<1x64x128xbf16, #tpu.memory_space<vmem>>, %arg3: memref<128x512xbf16, #tpu.memory_space<vmem>>, %arg4: memref<128x512xbf16, #tpu.memory_space<vmem>>, %arg5: memref<1x512xf32, #tpu.memory_space<vmem>>, %arg6: memref<8x128xf32, #tpu.memory_space<vmem>>, %arg7: memref<64x512xf32, #tpu.memory_space<vmem>>, %arg8: memref<8x128xf32, #tpu.memory_space<vmem>>) attributes {dimension_semantics = [#tpu.dimension_semantics<arbitrary>, #tpu.dimension_semantics<arbitrary>], iteration_bounds = array<i64: 1, 1>, scalar_prefetch = 0 : i64, scratch_operands = 2 : i64, tpu.core_type = #tpu.core_type<tc>, window_params = [{transform_indices = @transform_0, window_bounds = array<i64: 1, 64, 128>}, {pipeline_mode = #tpu.pipeline_mode<synchronous>, transform_indices = @transform_1, window_bounds = array<i64: 128, 512>}, {pipeline_mode = #tpu.pipeline_mode<synchronous>, transform_indices = @transform_2, window_bounds = array<i64: 128, 512>}, {pipeline_mode = #tpu.pipeline_mode<synchronous>, transform_indices = @transform_3, window_bounds = array<i64: 1, 512>}, {transform_indices = @transform_4, window_bounds = array<i64: 8, 128>}]} {
    %c0_i32 = arith.constant 0 : i32
    %0 = arith.cmpi eq, %arg1, %c0_i32 : i32
    %1 = arith.extui %0 : i1 to i32
    %c0_i32_0 = arith.constant 0 : i32
    %2 = arith.cmpi ne, %1, %c0_i32_0 : i32
    scf.if %2 {
      %cst_52 = arith.constant 0.000000e+00 : f32
      %200 = vector.broadcast %cst_52 : f32 to vector<8x128xf32>
      %c0_53 = arith.constant 0 : index
      %c0_54 = arith.constant 0 : index
      %201 = vector.load %arg6[%c0_53, %c0_54] : memref<8x128xf32, #tpu.memory_space<vmem>>, vector<8x128xf32>
      tpu.vector_store %arg6[%c0_53, %c0_54], %200 {strides = array<i32>} : memref<8x128xf32, #tpu.memory_space<vmem>>, vector<8x128xf32>,
      %cst_55 = arith.constant 0.000000e+00 : f32
      %202 = vector.broadcast %cst_55 : f32 to vector<8x128xf32>
      %c0_56 = arith.constant 0 : index
      %c0_57 = arith.constant 0 : index
      %203 = vector.load %arg8[%c0_56, %c0_57] : memref<8x128xf32, #tpu.memory_space<vmem>>, vector<8x128xf32>
      tpu.vector_store %arg8[%c0_56, %c0_57], %202 {strides = array<i32>} : memref<8x128xf32, #tpu.memory_space<vmem>>, vector<8x128xf32>,
    } else {
    }
    %c0 = arith.constant 0 : index
    %c0_1 = arith.constant 0 : index
    %c0_2 = arith.constant 0 : index
    %3 = vector.load %arg2[%c0, %c0_1, %c0_2] : memref<1x64x128xbf16, #tpu.memory_space<vmem>>, vector<1x64x128xbf16>
    %4 = vector.shape_cast %3 : vector<1x64x128xbf16> to vector<64x128xbf16>
    %c0_3 = arith.constant 0 : index
    %c0_4 = arith.constant 0 : index
    %5 = vector.load %arg3[%c0_3, %c0_4] : memref<128x512xbf16, #tpu.memory_space<vmem>>, vector<128x512xbf16>
    %cst = arith.constant dense<0.000000e+00> : vector<64x512xf32>
    %6 = tpu.matmul %4, %5, %cst {dimension_numbers = #tpu.dot_dimension_numbers<[1], [0], [0], [1], [0, 0, 1, 1], [], []>} : vector<64x128xbf16>, vector<128x512xbf16>, vector<64x512xf32> -> vector<64x512xf32>
    %c0_5 = arith.constant 0 : index
    %c0_6 = arith.constant 0 : index
    %7 = vector.load %arg5[%c0_5, %c0_6] : memref<1x512xf32, #tpu.memory_space<vmem>>, vector<1x512xf32>
    %8 = vector.broadcast %7 : vector<1x512xf32> to vector<64x512xf32>
    %9 = arith.addf %6, %8 : vector<64x512xf32>
    %c0_7 = arith.constant 0 : index
    %c0_8 = arith.constant 0 : index
    %10 = vector.load %arg7[%c0_7, %c0_8] : memref<64x512xf32, #tpu.memory_space<vmem>>, vector<64x512xf32>
    tpu.vector_store %arg7[%c0_7, %c0_8], %9 {strides = array<i32>} : memref<64x512xf32, #tpu.memory_space<vmem>>, vector<64x512xf32>,
    %c0_9 = arith.constant 0 : index
    %c0_10 = arith.constant 0 : index
    %11 = vector.load %arg4[%c0_9, %c0_10] : memref<128x512xbf16, #tpu.memory_space<vmem>>, vector<128x512xbf16>
    %c0_11 = arith.constant 0 : index
    %c0_12 = arith.constant 0 : index
    %12 = vector.load %arg6[%c0_11, %c0_12] : memref<8x128xf32, #tpu.memory_space<vmem>>, vector<8x128xf32>
    %c0_13 = arith.constant 0 : index
    %c0_14 = arith.constant 0 : index
    %13 = vector.load %arg8[%c0_13, %c0_14] : memref<8x128xf32, #tpu.memory_space<vmem>>, vector<8x128xf32>
    %c0_i32_15 = arith.constant 0 : i32
    %c8_i32 = arith.constant 8 : i32
    %14 = arith.muli %c0_i32_15, %c8_i32 : i32
    %15 = tpu.assume_multiple %14, 8 : i32
    %16 = arith.index_cast %15 : i32 to index
    %c0_16 = arith.constant 0 : index
    %17 = vector.load %arg7[%16, %c0_16] : memref<64x512xf32, #tpu.memory_space<vmem>>, vector<8x512xf32>
    %18 = arith.truncf %12 : vector<8x128xf32> to vector<8x128xbf16>
    %cst_17 = arith.constant dense<0.000000e+00> : vector<8x512xf32>
    %19 = tpu.matmul %18, %11, %cst_17 {dimension_numbers = #tpu.dot_dimension_numbers<[1], [0], [0], [1], [0, 0, 1, 1], [], []>} : vector<8x128xbf16>, vector<128x512xbf16>, vector<8x512xf32> -> vector<8x512xf32>
    %20 = arith.addf %17, %19 : vector<8x512xf32>
    %21 = vector.extract_strided_slice %20 {offsets = [0, 0], sizes = [8, 384], strides = [1, 1]} : vector<8x512xf32> to vector<8x384xf32>
    %22 = arith.negf %21 : vector<8x384xf32>
    %23 = math.exp %22 : vector<8x384xf32>
    %cst_18 = arith.constant 1.000000e+00 : f32
    %24 = vector.broadcast %cst_18 : f32 to vector<8x384xf32>
    %25 = arith.addf %24, %23 : vector<8x384xf32>
    %26 = arith.divf %24, %25 : vector<8x384xf32>
    %27 = vector.extract_strided_slice %26 {offsets = [0, 0], sizes = [8, 128], strides = [1, 1]} : vector<8x384xf32> to vector<8x128xf32>
    %28 = vector.extract_strided_slice %26 {offsets = [0, 128], sizes = [8, 128], strides = [1, 1]} : vector<8x384xf32> to vector<8x128xf32>
    %29 = vector.extract_strided_slice %26 {offsets = [0, 256], sizes = [8, 128], strides = [1, 1]} : vector<8x384xf32> to vector<8x128xf32>
    %30 = vector.extract_strided_slice %20 {offsets = [0, 384], sizes = [8, 128], strides = [1, 1]} : vector<8x512xf32> to vector<8x128xf32>
    %31 = math.tanh %30 : vector<8x128xf32>
    %32 = arith.mulf %28, %13 : vector<8x128xf32>
    %33 = arith.mulf %27, %31 : vector<8x128xf32>
    %34 = arith.addf %32, %33 : vector<8x128xf32>
    %35 = math.tanh %34 : vector<8x128xf32>
    %36 = arith.mulf %29, %35 : vector<8x128xf32>
    %c1_i32 = arith.constant 1 : i32
    %c8_i32_19 = arith.constant 8 : i32
    %37 = arith.muli %c1_i32, %c8_i32_19 : i32
    %38 = tpu.assume_multiple %37, 8 : i32
    %39 = arith.index_cast %38 : i32 to index
    %c0_20 = arith.constant 0 : index
    %40 = vector.load %arg7[%39, %c0_20] : memref<64x512xf32, #tpu.memory_space<vmem>>, vector<8x512xf32>
    %41 = arith.truncf %36 : vector<8x128xf32> to vector<8x128xbf16>
    %cst_21 = arith.constant dense<0.000000e+00> : vector<8x512xf32>
    %42 = tpu.matmul %41, %11, %cst_21 {dimension_numbers = #tpu.dot_dimension_numbers<[1], [0], [0], [1], [0, 0, 1, 1], [], []>} : vector<8x128xbf16>, vector<128x512xbf16>, vector<8x512xf32> -> vector<8x512xf32>
    %43 = arith.addf %40, %42 : vector<8x512xf32>
    %44 = vector.extract_strided_slice %43 {offsets = [0, 0], sizes = [8, 384], strides = [1, 1]} : vector<8x512xf32> to vector<8x384xf32>
    %45 = arith.negf %44 : vector<8x384xf32>
    %46 = math.exp %45 : vector<8x384xf32>
    %cst_22 = arith.constant 1.000000e+00 : f32
    %47 = vector.broadcast %cst_22 : f32 to vector<8x384xf32>
    %48 = arith.addf %47, %46 : vector<8x384xf32>
    %49 = arith.divf %47, %48 : vector<8x384xf32>
    %50 = vector.extract_strided_slice %49 {offsets = [0, 0], sizes = [8, 128], strides = [1, 1]} : vector<8x384xf32> to vector<8x128xf32>
    %51 = vector.extract_strided_slice %49 {offsets = [0, 128], sizes = [8, 128], strides = [1, 1]} : vector<8x384xf32> to vector<8x128xf32>
    %52 = vector.extract_strided_slice %49 {offsets = [0, 256], sizes = [8, 128], strides = [1, 1]} : vector<8x384xf32> to vector<8x128xf32>
    %53 = vector.extract_strided_slice %43 {offsets = [0, 384], sizes = [8, 128], strides = [1, 1]} : vector<8x512xf32> to vector<8x128xf32>
    %54 = math.tanh %53 : vector<8x128xf32>
    %55 = arith.mulf %51, %34 : vector<8x128xf32>
    %56 = arith.mulf %50, %54 : vector<8x128xf32>
    %57 = arith.addf %55, %56 : vector<8x128xf32>
    %58 = math.tanh %57 : vector<8x128xf32>
    %59 = arith.mulf %52, %58 : vector<8x128xf32>
    %c2_i32 = arith.constant 2 : i32
    %c8_i32_23 = arith.constant 8 : i32
    %60 = arith.muli %c2_i32, %c8_i32_23 : i32
    %61 = tpu.assume_multiple %60, 8 : i32
    %62 = arith.index_cast %61 : i32 to index
    %c0_24 = arith.constant 0 : index
    %63 = vector.load %arg7[%62, %c0_24] : memref<64x512xf32, #tpu.memory_space<vmem>>, vector<8x512xf32>
    %64 = arith.truncf %59 : vector<8x128xf32> to vector<8x128xbf16>
    %cst_25 = arith.constant dense<0.000000e+00> : vector<8x512xf32>
    %65 = tpu.matmul %64, %11, %cst_25 {dimension_numbers = #tpu.dot_dimension_numbers<[1], [0], [0], [1], [0, 0, 1, 1], [], []>} : vector<8x128xbf16>, vector<128x512xbf16>, vector<8x512xf32> -> vector<8x512xf32>
    %66 = arith.addf %63, %65 : vector<8x512xf32>
    %67 = vector.extract_strided_slice %66 {offsets = [0, 0], sizes = [8, 384], strides = [1, 1]} : vector<8x512xf32> to vector<8x384xf32>
    %68 = arith.negf %67 : vector<8x384xf32>
    %69 = math.exp %68 : vector<8x384xf32>
    %cst_26 = arith.constant 1.000000e+00 : f32
    %70 = vector.broadcast %cst_26 : f32 to vector<8x384xf32>
    %71 = arith.addf %70, %69 : vector<8x384xf32>
    %72 = arith.divf %70, %71 : vector<8x384xf32>
    %73 = vector.extract_strided_slice %72 {offsets = [0, 0], sizes = [8, 128], strides = [1, 1]} : vector<8x384xf32> to vector<8x128xf32>
    %74 = vector.extract_strided_slice %72 {offsets = [0, 128], sizes = [8, 128], strides = [1, 1]} : vector<8x384xf32> to vector<8x128xf32>
    %75 = vector.extract_strided_slice %72 {offsets = [0, 256], sizes = [8, 128], strides = [1, 1]} : vector<8x384xf32> to vector<8x128xf32>
    %76 = vector.extract_strided_slice %66 {offsets = [0, 384], sizes = [8, 128], strides = [1, 1]} : vector<8x512xf32> to vector<8x128xf32>
    %77 = math.tanh %76 : vector<8x128xf32>
    %78 = arith.mulf %74, %57 : vector<8x128xf32>
    %79 = arith.mulf %73, %77 : vector<8x128xf32>
    %80 = arith.addf %78, %79 : vector<8x128xf32>
    %81 = math.tanh %80 : vector<8x128xf32>
    %82 = arith.mulf %75, %81 : vector<8x128xf32>
    %c3_i32 = arith.constant 3 : i32
    %c8_i32_27 = arith.constant 8 : i32
    %83 = arith.muli %c3_i32, %c8_i32_27 : i32
    %84 = tpu.assume_multiple %83, 8 : i32
    %85 = arith.index_cast %84 : i32 to index
    %c0_28 = arith.constant 0 : index
    %86 = vector.load %arg7[%85, %c0_28] : memref<64x512xf32, #tpu.memory_space<vmem>>, vector<8x512xf32>
    %87 = arith.truncf %82 : vector<8x128xf32> to vector<8x128xbf16>
    %cst_29 = arith.constant dense<0.000000e+00> : vector<8x512xf32>
    %88 = tpu.matmul %87, %11, %cst_29 {dimension_numbers = #tpu.dot_dimension_numbers<[1], [0], [0], [1], [0, 0, 1, 1], [], []>} : vector<8x128xbf16>, vector<128x512xbf16>, vector<8x512xf32> -> vector<8x512xf32>
    %89 = arith.addf %86, %88 : vector<8x512xf32>
    %90 = vector.extract_strided_slice %89 {offsets = [0, 0], sizes = [8, 384], strides = [1, 1]} : vector<8x512xf32> to vector<8x384xf32>
    %91 = arith.negf %90 : vector<8x384xf32>
    %92 = math.exp %91 : vector<8x384xf32>
    %cst_30 = arith.constant 1.000000e+00 : f32
    %93 = vector.broadcast %cst_30 : f32 to vector<8x384xf32>
    %94 = arith.addf %93, %92 : vector<8x384xf32>
    %95 = arith.divf %93, %94 : vector<8x384xf32>
    %96 = vector.extract_strided_slice %95 {offsets = [0, 0], sizes = [8, 128], strides = [1, 1]} : vector<8x384xf32> to vector<8x128xf32>
    %97 = vector.extract_strided_slice %95 {offsets = [0, 128], sizes = [8, 128], strides = [1, 1]} : vector<8x384xf32> to vector<8x128xf32>
    %98 = vector.extract_strided_slice %95 {offsets = [0, 256], sizes = [8, 128], strides = [1, 1]} : vector<8x384xf32> to vector<8x128xf32>
    %99 = vector.extract_strided_slice %89 {offsets = [0, 384], sizes = [8, 128], strides = [1, 1]} : vector<8x512xf32> to vector<8x128xf32>
    %100 = math.tanh %99 : vector<8x128xf32>
    %101 = arith.mulf %97, %80 : vector<8x128xf32>
    %102 = arith.mulf %96, %100 : vector<8x128xf32>
    %103 = arith.addf %101, %102 : vector<8x128xf32>
    %104 = math.tanh %103 : vector<8x128xf32>
    %105 = arith.mulf %98, %104 : vector<8x128xf32>
    %c4_i32 = arith.constant 4 : i32
    %c8_i32_31 = arith.constant 8 : i32
    %106 = arith.muli %c4_i32, %c8_i32_31 : i32
    %107 = tpu.assume_multiple %106, 8 : i32
    %108 = arith.index_cast %107 : i32 to index
    %c0_32 = arith.constant 0 : index
    %109 = vector.load %arg7[%108, %c0_32] : memref<64x512xf32, #tpu.memory_space<vmem>>, vector<8x512xf32>
    %110 = arith.truncf %105 : vector<8x128xf32> to vector<8x128xbf16>
    %cst_33 = arith.constant dense<0.000000e+00> : vector<8x512xf32>
    %111 = tpu.matmul %110, %11, %cst_33 {dimension_numbers = #tpu.dot_dimension_numbers<[1], [0], [0], [1], [0, 0, 1, 1], [], []>} : vector<8x128xbf16>, vector<128x512xbf16>, vector<8x512xf32> -> vector<8x512xf32>
    %112 = arith.addf %109, %111 : vector<8x512xf32>
    %113 = vector.extract_strided_slice %112 {offsets = [0, 0], sizes = [8, 384], strides = [1, 1]} : vector<8x512xf32> to vector<8x384xf32>
    %114 = arith.negf %113 : vector<8x384xf32>
    %115 = math.exp %114 : vector<8x384xf32>
    %cst_34 = arith.constant 1.000000e+00 : f32
    %116 = vector.broadcast %cst_34 : f32 to vector<8x384xf32>
    %117 = arith.addf %116, %115 : vector<8x384xf32>
    %118 = arith.divf %116, %117 : vector<8x384xf32>
    %119 = vector.extract_strided_slice %118 {offsets = [0, 0], sizes = [8, 128], strides = [1, 1]} : vector<8x384xf32> to vector<8x128xf32>
    %120 = vector.extract_strided_slice %118 {offsets = [0, 128], sizes = [8, 128], strides = [1, 1]} : vector<8x384xf32> to vector<8x128xf32>
    %121 = vector.extract_strided_slice %118 {offsets = [0, 256], sizes = [8, 128], strides = [1, 1]} : vector<8x384xf32> to vector<8x128xf32>
    %122 = vector.extract_strided_slice %112 {offsets = [0, 384], sizes = [8, 128], strides = [1, 1]} : vector<8x512xf32> to vector<8x128xf32>
    %123 = math.tanh %122 : vector<8x128xf32>
    %124 = arith.mulf %120, %103 : vector<8x128xf32>
    %125 = arith.mulf %119, %123 : vector<8x128xf32>
    %126 = arith.addf %124, %125 : vector<8x128xf32>
    %127 = math.tanh %126 : vector<8x128xf32>
    %128 = arith.mulf %121, %127 : vector<8x128xf32>
    %c5_i32 = arith.constant 5 : i32
    %c8_i32_35 = arith.constant 8 : i32
    %129 = arith.muli %c5_i32, %c8_i32_35 : i32
    %130 = tpu.assume_multiple %129, 8 : i32
    %131 = arith.index_cast %130 : i32 to index
    %c0_36 = arith.constant 0 : index
    %132 = vector.load %arg7[%131, %c0_36] : memref<64x512xf32, #tpu.memory_space<vmem>>, vector<8x512xf32>
    %133 = arith.truncf %128 : vector<8x128xf32> to vector<8x128xbf16>
    %cst_37 = arith.constant dense<0.000000e+00> : vector<8x512xf32>
    %134 = tpu.matmul %133, %11, %cst_37 {dimension_numbers = #tpu.dot_dimension_numbers<[1], [0], [0], [1], [0, 0, 1, 1], [], []>} : vector<8x128xbf16>, vector<128x512xbf16>, vector<8x512xf32> -> vector<8x512xf32>
    %135 = arith.addf %132, %134 : vector<8x512xf32>
    %136 = vector.extract_strided_slice %135 {offsets = [0, 0], sizes = [8, 384], strides = [1, 1]} : vector<8x512xf32> to vector<8x384xf32>
    %137 = arith.negf %136 : vector<8x384xf32>
    %138 = math.exp %137 : vector<8x384xf32>
    %cst_38 = arith.constant 1.000000e+00 : f32
    %139 = vector.broadcast %cst_38 : f32 to vector<8x384xf32>
    %140 = arith.addf %139, %138 : vector<8x384xf32>
    %141 = arith.divf %139, %140 : vector<8x384xf32>
    %142 = vector.extract_strided_slice %141 {offsets = [0, 0], sizes = [8, 128], strides = [1, 1]} : vector<8x384xf32> to vector<8x128xf32>
    %143 = vector.extract_strided_slice %141 {offsets = [0, 128], sizes = [8, 128], strides = [1, 1]} : vector<8x384xf32> to vector<8x128xf32>
    %144 = vector.extract_strided_slice %141 {offsets = [0, 256], sizes = [8, 128], strides = [1, 1]} : vector<8x384xf32> to vector<8x128xf32>
    %145 = vector.extract_strided_slice %135 {offsets = [0, 384], sizes = [8, 128], strides = [1, 1]} : vector<8x512xf32> to vector<8x128xf32>
    %146 = math.tanh %145 : vector<8x128xf32>
    %147 = arith.mulf %143, %126 : vector<8x128xf32>
    %148 = arith.mulf %142, %146 : vector<8x128xf32>
    %149 = arith.addf %147, %148 : vector<8x128xf32>
    %150 = math.tanh %149 : vector<8x128xf32>
    %151 = arith.mulf %144, %150 : vector<8x128xf32>
    %c6_i32 = arith.constant 6 : i32
    %c8_i32_39 = arith.constant 8 : i32
    %152 = arith.muli %c6_i32, %c8_i32_39 : i32
    %153 = tpu.assume_multiple %152, 8 : i32
    %154 = arith.index_cast %153 : i32 to index
    %c0_40 = arith.constant 0 : index
    %155 = vector.load %arg7[%154, %c0_40] : memref<64x512xf32, #tpu.memory_space<vmem>>, vector<8x512xf32>
    %156 = arith.truncf %151 : vector<8x128xf32> to vector<8x128xbf16>
    %cst_41 = arith.constant dense<0.000000e+00> : vector<8x512xf32>
    %157 = tpu.matmul %156, %11, %cst_41 {dimension_numbers = #tpu.dot_dimension_numbers<[1], [0], [0], [1], [0, 0, 1, 1], [], []>} : vector<8x128xbf16>, vector<128x512xbf16>, vector<8x512xf32> -> vector<8x512xf32>
    %158 = arith.addf %155, %157 : vector<8x512xf32>
    %159 = vector.extract_strided_slice %158 {offsets = [0, 0], sizes = [8, 384], strides = [1, 1]} : vector<8x512xf32> to vector<8x384xf32>
    %160 = arith.negf %159 : vector<8x384xf32>
    %161 = math.exp %160 : vector<8x384xf32>
    %cst_42 = arith.constant 1.000000e+00 : f32
    %162 = vector.broadcast %cst_42 : f32 to vector<8x384xf32>
    %163 = arith.addf %162, %161 : vector<8x384xf32>
    %164 = arith.divf %162, %163 : vector<8x384xf32>
    %165 = vector.extract_strided_slice %164 {offsets = [0, 0], sizes = [8, 128], strides = [1, 1]} : vector<8x384xf32> to vector<8x128xf32>
    %166 = vector.extract_strided_slice %164 {offsets = [0, 128], sizes = [8, 128], strides = [1, 1]} : vector<8x384xf32> to vector<8x128xf32>
    %167 = vector.extract_strided_slice %164 {offsets = [0, 256], sizes = [8, 128], strides = [1, 1]} : vector<8x384xf32> to vector<8x128xf32>
    %168 = vector.extract_strided_slice %158 {offsets = [0, 384], sizes = [8, 128], strides = [1, 1]} : vector<8x512xf32> to vector<8x128xf32>
    %169 = math.tanh %168 : vector<8x128xf32>
    %170 = arith.mulf %166, %149 : vector<8x128xf32>
    %171 = arith.mulf %165, %169 : vector<8x128xf32>
    %172 = arith.addf %170, %171 : vector<8x128xf32>
    %173 = math.tanh %172 : vector<8x128xf32>
    %174 = arith.mulf %167, %173 : vector<8x128xf32>
    %c7_i32 = arith.constant 7 : i32
    %c8_i32_43 = arith.constant 8 : i32
    %175 = arith.muli %c7_i32, %c8_i32_43 : i32
    %176 = tpu.assume_multiple %175, 8 : i32
    %177 = arith.index_cast %176 : i32 to index
    %c0_44 = arith.constant 0 : index
    %178 = vector.load %arg7[%177, %c0_44] : memref<64x512xf32, #tpu.memory_space<vmem>>, vector<8x512xf32>
    %179 = arith.truncf %174 : vector<8x128xf32> to vector<8x128xbf16>
    %cst_45 = arith.constant dense<0.000000e+00> : vector<8x512xf32>
    %180 = tpu.matmul %179, %11, %cst_45 {dimension_numbers = #tpu.dot_dimension_numbers<[1], [0], [0], [1], [0, 0, 1, 1], [], []>} : vector<8x128xbf16>, vector<128x512xbf16>, vector<8x512xf32> -> vector<8x512xf32>
    %181 = arith.addf %178, %180 : vector<8x512xf32>
    %182 = vector.extract_strided_slice %181 {offsets = [0, 0], sizes = [8, 384], strides = [1, 1]} : vector<8x512xf32> to vector<8x384xf32>
    %183 = arith.negf %182 : vector<8x384xf32>
    %184 = math.exp %183 : vector<8x384xf32>
    %cst_46 = arith.constant 1.000000e+00 : f32
    %185 = vector.broadcast %cst_46 : f32 to vector<8x384xf32>
    %186 = arith.addf %185, %184 : vector<8x384xf32>
    %187 = arith.divf %185, %186 : vector<8x384xf32>
    %188 = vector.extract_strided_slice %187 {offsets = [0, 0], sizes = [8, 128], strides = [1, 1]} : vector<8x384xf32> to vector<8x128xf32>
    %189 = vector.extract_strided_slice %187 {offsets = [0, 128], sizes = [8, 128], strides = [1, 1]} : vector<8x384xf32> to vector<8x128xf32>
    %190 = vector.extract_strided_slice %187 {offsets = [0, 256], sizes = [8, 128], strides = [1, 1]} : vector<8x384xf32> to vector<8x128xf32>
    %191 = vector.extract_strided_slice %181 {offsets = [0, 384], sizes = [8, 128], strides = [1, 1]} : vector<8x512xf32> to vector<8x128xf32>
    %192 = math.tanh %191 : vector<8x128xf32>
    %193 = arith.mulf %189, %172 : vector<8x128xf32>
    %194 = arith.mulf %188, %192 : vector<8x128xf32>
    %195 = arith.addf %193, %194 : vector<8x128xf32>
    %196 = math.tanh %195 : vector<8x128xf32>
    %197 = arith.mulf %190, %196 : vector<8x128xf32>
    %c8_i32_47 = arith.constant 8 : i32
    %c0_48 = arith.constant 0 : index
    %c0_49 = arith.constant 0 : index
    %198 = vector.load %arg6[%c0_48, %c0_49] : memref<8x128xf32, #tpu.memory_space<vmem>>, vector<8x128xf32>
    tpu.vector_store %arg6[%c0_48, %c0_49], %197 {strides = array<i32>} : memref<8x128xf32, #tpu.memory_space<vmem>>, vector<8x128xf32>,
    %c0_50 = arith.constant 0 : index
    %c0_51 = arith.constant 0 : index
    %199 = vector.load %arg8[%c0_50, %c0_51] : memref<8x128xf32, #tpu.memory_space<vmem>>, vector<8x128xf32>
    tpu.vector_store %arg8[%c0_50, %c0_51], %195 {strides = array<i32>} : memref<8x128xf32, #tpu.memory_space<vmem>>, vector<8x128xf32>,
    return
  }
  func.func @transform_0(%arg0: i32, %arg1: i32) -> (i32, i32, i32) {
    %c0_i32 = arith.constant 0 : i32
    %c0_i32_0 = arith.constant 0 : i32
    return %arg0, %arg1, %c0_i32 : i32, i32, i32
  }
  func.func @transform_1(%arg0: i32, %arg1: i32) -> (i32, i32) {
    %c0_i32 = arith.constant 0 : i32
    %c0_i32_0 = arith.constant 0 : i32
    %c0_i32_1 = arith.constant 0 : i32
    return %c0_i32, %c0_i32_0 : i32, i32
  }
  func.func @transform_2(%arg0: i32, %arg1: i32) -> (i32, i32) {
    %c0_i32 = arith.constant 0 : i32
    %c0_i32_0 = arith.constant 0 : i32
    %c0_i32_1 = arith.constant 0 : i32
    return %c0_i32, %c0_i32_0 : i32, i32
  }
  func.func @transform_3(%arg0: i32, %arg1: i32) -> (i32, i32) {
    %c0_i32 = arith.constant 0 : i32
    %c0_i32_0 = arith.constant 0 : i32
    %c0_i32_1 = arith.constant 0 : i32
    return %c0_i32, %c0_i32_0 : i32, i32
  }
  func.func @transform_4(%arg0: i32, %arg1: i32) -> (i32, i32) {
    %c0_i32 = arith.constant 0 : i32
    %c0_i32_0 = arith.constant 0 : i32
    return %arg0, %c0_i32 : i32, i32
  }
}

</mosaic_0001>

<llo_original>
// kernel: lstm_last_hidden.1
$region0: #{lstm_last_hidden.1}
  #allocation0 [shape = 'u32[]', space=smem, size = 0x4, offset = 0x4, fixed_abs, tag = 'smem constant byte address 0x4 - core index']
  #allocation1 [shape = 'u32[144,128]{1,0:T(1,128)}', space=vmem, size = 0x12000, scoped, tag = 'internal scratch']
  #allocation2 [shape = 'f32[64,512]{1,0:T(8,128)}', space=vmem, size = 0x20000, scoped, tag = 'scratch operand']
  #allocation3 [shape = 'f32[8,128]{1,0:T(8,128)}', space=vmem, size = 0x1000, scoped, tag = 'scratch operand']
  %s0 = inlined_call_operand.vmem [shape: bf16[1,64,128], index: 0, kind: input, shape index: {}]
  %s1 = inlined_call_operand.hbm [shape: bf16[128,512], index: 1, kind: input, shape index: {}]
  %s2 = inlined_call_operand.hbm [shape: bf16[128,512], index: 2, kind: input, shape index: {}]
  %s3 = inlined_call_operand.vmem [shape: f32[1,512], index: 3, kind: input, shape index: {}]
  %s4 = inlined_call_operand.vmem [shape: f32[8,128], index: 4, kind: output, shape index: {}]
  %s5 = sld [smem:[#allocation0]]
  $region38: #{lstm_last_hidden.1} parent=0
    _
  %s7 = ssub.s32 1, %s5
  %s8 = scalar_select 0, %s7, %s5
  $region1: #{lstm_last_hidden.1} parent=0
    #allocation4 [shape = 'u8[131072]{0}', space=vmem, size = 0x20000, scoped, tag = 'input window, operand 1, single buffered']
    #allocation5 [shape = 's32[1]{0}', space=sflag, size = 0x4, scoped, tag = 'scoped memory for lstm_last_hidden.1']
    #allocation6 [shape = 'u8[131072]{0}', space=vmem, size = 0x20000, scoped, tag = 'input window, operand 2, single buffered']
    #allocation7 [shape = 's32[1]{0}', space=sflag, size = 0x4, scoped, tag = 'scoped memory for lstm_last_hidden.1']
    %9 = vsyncpa [#allocation5], 0
    %10 = vsyncpa [#allocation7], 0
    // Predicated region
    $region2: #{lstm_last_hidden.1} parent=1 // pred_check
      _
    $region3: #{lstm_last_hidden.1} parent=1 // pred_check_branch
      %12 = sbr.rel (0) target = $region5
    $region4: #{lstm_last_hidden.1} parent=1 // pred_region
      _
    $region5: #{lstm_last_hidden.1} parent=1 // pred_fallthru
      _
    // Predicated region
    $region6: #{lstm_last_hidden.1} parent=1 // pred_check
      _
    $region7: #{lstm_last_hidden.1} parent=1 // pred_check_branch
      %14 = sbr.rel (0) target = $region9
    $region8: #{lstm_last_hidden.1} parent=1 // pred_region
      %s16 = ssub.s32 4096, 4096
      %17 = vsyncadd [#allocation5], %s16
      %s18 = sshll.u32 [#allocation4], 4
      %s19 = int_to_ptr.vmem [resolvable:$true] %s18
      %24 = dma.hbm_to_vmem [thread:$0]  %s1, 4096, %s19, [#allocation5], 256, 256, 16
    $region9: #{lstm_last_hidden.1} parent=1 // pred_fallthru
      _
    // Predicated region
    $region10: #{lstm_last_hidden.1} parent=1 // pred_check
      _
    $region11: #{lstm_last_hidden.1} parent=1 // pred_check_branch
      %26 = sbr.rel (0) target = $region13
    $region12: #{lstm_last_hidden.1} parent=1 // pred_region
      %s28 = ssub.s32 4096, 4096
      %29 = vsyncadd [#allocation7], %s28
      %s30 = sshll.u32 [#allocation6], 4
      %s31 = int_to_ptr.vmem [resolvable:$true] %s30
      %36 = dma.hbm_to_vmem [thread:$0]  %s2, 4096, %s31, [#allocation7], 256, 256, 16
    $region13: #{lstm_last_hidden.1} parent=1 // pred_fallthru
      _
    // Predicated region
    $region14: #{lstm_last_hidden.1} parent=1 // pred_check
      _
    $region15: #{lstm_last_hidden.1} parent=1 // pred_check_branch
      %38 = sbr.rel (0) target = $region17
    $region16: #{lstm_last_hidden.1} parent=1 // pred_region
      _
    $region17: #{lstm_last_hidden.1} parent=1 // pred_fallthru
      _
    // Predicated region
    $region18: #{lstm_last_hidden.1} parent=1 // pred_check
      _
    $region19: #{lstm_last_hidden.1} parent=1 // pred_check_branch
      %40 = sbr.rel (0) target = $region21
    $region20: #{lstm_last_hidden.1} parent=1 // pred_region
      %41 = dma.done [#allocation5], 4096
    $region21: #{lstm_last_hidden.1} parent=1 // pred_fallthru
      _
    // Predicated region
    $region22: #{lstm_last_hidden.1} parent=1 // pred_check
      _
    $region23: #{lstm_last_hidden.1} parent=1 // pred_check_branch
      %43 = sbr.rel (0) target = $region25
    $region24: #{lstm_last_hidden.1} parent=1 // pred_region
      %44 = dma.done [#allocation7], 4096
    $region25: #{lstm_last_hidden.1} parent=1 // pred_fallthru
      _
    %p46 = scmp.eq.s32.totalorder 0, 0
    // Predicated region
    $region26: #{lstm_last_hidden.1} parent=1 // pred_check
      %p47 = pneg %p46
    $region27: #{lstm_last_hidden.1} parent=1 // pred_check_branch
      %49 = sbr.rel (%p47) target = $region29
    $region28: #{lstm_last_hidden.1} parent=1 // pred_region
      %50 = vst [vmem:[%s4] sm:$0xff] 0.0
      %51 = vst [vmem:[#allocation3] sm:$0xff] 0.0
    $region29: #{lstm_last_hidden.1} parent=1 // pred_fallthru
      _
    %v52 = vld [vmem:[%s0] sm:$0xf]
    %v53 = vld [vmem:[%s0 + $0x4] sm:$0xf]
    %v54 = vld [vmem:[%s0 + $0x8] sm:$0xf]
    %v55 = vld [vmem:[%s0 + $0xc] sm:$0xf]
    %v56 = vld [vmem:[%s0 + $0x10] sm:$0xf]
    %v57 = vld [vmem:[%s0 + $0x14] sm:$0xf]
    %v58 = vld [vmem:[%s0 + $0x18] sm:$0xf]
    %v59 = vld [vmem:[%s0 + $0x1c] sm:$0xf]
    %v60 = vld [vmem:[#allocation4] sm:$0xff]
    %v61 = vld [vmem:[#allocation4 + $0x8] sm:$0xff]
    %v62 = vld [vmem:[#allocation4 + $0x10] sm:$0xff]
    %v63 = vld [vmem:[#allocation4 + $0x18] sm:$0xff]
    %v64 = vld [vmem:[#allocation4 + $0x20] sm:$0xff]
    %v65 = vld [vmem:[#allocation4 + $0x28] sm:$0xff]
    %v66 = vld [vmem:[#allocation4 + $0x30] sm:$0xff]
    %v67 = vld [vmem:[#allocation4 + $0x38] sm:$0xff]
    %v68 = vld [vmem:[#allocation4 + $0x40] sm:$0xff]
    %v69 = vld [vmem:[#allocation4 + $0x48] sm:$0xff]
    %v70 = vld [vmem:[#allocation4 + $0x50] sm:$0xff]
    %v71 = vld [vmem:[#allocation4 + $0x58] sm:$0xff]
    %v72 = vld [vmem:[#allocation4 + $0x60] sm:$0xff]
    %v73 = vld [vmem:[#allocation4 + $0x68] sm:$0xff]
    %v74 = vld [vmem:[#allocation4 + $0x70] sm:$0xff]
    %v75 = vld [vmem:[#allocation4 + $0x78] sm:$0xff]
    %v76 = vld [vmem:[#allocation4 + $0x80] sm:$0xff]
    %v77 = vld [vmem:[#allocation4 + $0x88] sm:$0xff]
    %v78 = vld [vmem:[#allocation4 + $0x90] sm:$0xff]
    %v79 = vld [vmem:[#allocation4 + $0x98] sm:$0xff]
    %v80 = vld [vmem:[#allocation4 + $0xa0] sm:$0xff]
    %v81 = vld [vmem:[#allocation4 + $0xa8] sm:$0xff]
    %v82 = vld [vmem:[#allocation4 + $0xb0] sm:$0xff]
    %v83 = vld [vmem:[#allocation4 + $0xb8] sm:$0xff]
    %v84 = vld [vmem:[#allocation4 + $0xc0] sm:$0xff]
    %v85 = vld [vmem:[#allocation4 + $0xc8] sm:$0xff]
    %v86 = vld [vmem:[#allocation4 + $0xd0] sm:$0xff]
    %v87 = vld [vmem:[#allocation4 + $0xd8] sm:$0xff]
    %v88 = vld [vmem:[#allocation4 + $0xe0] sm:$0xff]
    %v89 = vld [vmem:[#allocation4 + $0xe8] sm:$0xff]
    %v90 = vld [vmem:[#allocation4 + $0xf0] sm:$0xff]
    %v91 = vld [vmem:[#allocation4 + $0xf8] sm:$0xff]
    %v92 = vld [vmem:[%s3] sm:$0xf]
    %v94 = vlaneseq
    %v95 = vshrl.u32 %v94, 7
    %v96 = vsub.s32 0, %v95
    %v97 = vrot.slane %v92, %v96
    %v98 = vlaneseq
    %v99 = vshrl.u32 %v98, 7
    %v100 = vsub.s32 1, %v99
    %v101 = vrot.slane %v92, %v100
    %v102 = vlaneseq
    %v103 = vshrl.u32 %v102, 7
    %v104 = vsub.s32 2, %v103
    %v105 = vrot.slane %v92, %v104
    %v106 = vlaneseq
    %v107 = vshrl.u32 %v106, 7
    %v108 = vsub.s32 3, %v107
    %v109 = vrot.slane %v92, %v108
    %v122 = vunpack.c.l.b16 %v52
    %v123 = vunpack.c.l.b16 %v53
    %v124 = vunpack.c.l.b16 %v54
    %v125 = vunpack.c.l.b16 %v55
    %v126 = vunpack.c.l.b16 %v56
    %v127 = vunpack.c.l.b16 %v57
    %v128 = vunpack.c.l.b16 %v58
    %v129 = vunpack.c.l.b16 %v59
    %v130 = vpack.c.b16 %v123, %v122
    %v131 = vpack.c.b16 %v125, %v124
    %v132 = vpack.c.b16 %v127, %v126
    %v133 = vpack.c.b16 %v129, %v128
    %v170 = vunpack.c.l.b16 %v60
    %v171 = vunpack.c.h.b16 %v60
    %v172 = vunpack.c.l.b16 %v61
    %v173 = vunpack.c.h.b16 %v61
    %v174 = vunpack.c.l.b16 %v62
    %v175 = vunpack.c.h.b16 %v62
    %v176 = vunpack.c.l.b16 %v63
    %v177 = vunpack.c.h.b16 %v63
    %v178 = vunpack.c.l.b16 %v64
    %v179 = vunpack.c.h.b16 %v64
    %v180 = vunpack.c.l.b16 %v65
    %v181 = vunpack.c.h.b16 %v65
    %v182 = vunpack.c.l.b16 %v66
    %v183 = vunpack.c.h.b16 %v66
    %v184 = vunpack.c.l.b16 %v67
    %v185 = vunpack.c.h.b16 %v67
    %v186 = vunpack.c.l.b16 %v68
    %v187 = vunpack.c.h.b16 %v68
    %v188 = vunpack.c.l.b16 %v69
    %v189 = vunpack.c.h.b16 %v69
    %v190 = vunpack.c.l.b16 %v70
    %v191 = vunpack.c.h.b16 %v70
    %v192 = vunpack.c.l.b16 %v71
    %v193 = vunpack.c.h.b16 %v71
    %v194 = vunpack.c.l.b16 %v72
    %v195 = vunpack.c.h.b16 %v72
    %v196 = vunpack.c.l.b16 %v73
    %v197 = vunpack.c.h.b16 %v73
    %v198 = vunpack.c.l.b16 %v74
    %v199 = vunpack.c.h.b16 %v74
    %v200 = vunpack.c.l.b16 %v75
    %v201 = vunpack.c.h.b16 %v75
    %v202 = vunpack.c.l.b16 %v76
    %v203 = vunpack.c.h.b16 %v76
    %v204 = vunpack.c.l.b16 %v77
    %v205 = vunpack.c.h.b16 %v77
    %v206 = vunpack.c.l.b16 %v78
    %v207 = vunpack.c.h.b16 %v78
    %v208 = vunpack.c.l.b16 %v79
    %v209 = vunpack.c.h.b16 %v79
    %v210 = vunpack.c.l.b16 %v80
    %v211 = vunpack.c.h.b16 %v80
    %v212 = vunpack.c.l.b16 %v81
    %v213 = vunpack.c.h.b16 %v81
    %v214 = vunpack.c.l.b16 %v82
    %v215 = vunpack.c.h.b16 %v82
    %v216 = vunpack.c.l.b16 %v83
    %v217 = vunpack.c.h.b16 %v83
    %v218 = vunpack.c.l.b16 %v84
    %v219 = vunpack.c.h.b16 %v84
    %v220 = vunpack.c.l.b16 %v85
    %v221 = vunpack.c.h.b16 %v85
    %v222 = vunpack.c.l.b16 %v86
    %v223 = vunpack.c.h.b16 %v86
    %v224 = vunpack.c.l.b16 %v87
    %v225 = vunpack.c.h.b16 %v87
    %v226 = vunpack.c.l.b16 %v88
    %v227 = vunpack.c.h.b16 %v88
    %v228 = vunpack.c.l.b16 %v89
    %v229 = vunpack.c.h.b16 %v89
    %v230 = vunpack.c.l.b16 %v90
    %v231 = vunpack.c.h.b16 %v90
    %v232 = vunpack.c.l.b16 %v91
    %v233 = vunpack.c.h.b16 %v91
    %v234 = vpack.c.b16 %v174, %v170
    %v235 = vpack.c.b16 %v175, %v171
    %v236 = vpack.c.b16 %v176, %v172
    %v237 = vpack.c.b16 %v177, %v173
    %v238 = vpack.c.b16 %v182, %v178
    %v239 = vpack.c.b16 %v183, %v179
    %v240 = vpack.c.b16 %v184, %v180
    %v241 = vpack.c.b16 %v185, %v181
    %v242 = vpack.c.b16 %v190, %v186
    %v243 = vpack.c.b16 %v191, %v187
    %v244 = vpack.c.b16 %v192, %v188
    %v245 = vpack.c.b16 %v193, %v189
    %v246 = vpack.c.b16 %v198, %v194
    %v247 = vpack.c.b16 %v199, %v195
    %v248 = vpack.c.b16 %v200, %v196
    %v249 = vpack.c.b16 %v201, %v197
    %v250 = vpack.c.b16 %v206, %v202
    %v251 = vpack.c.b16 %v207, %v203
    %v252 = vpack.c.b16 %v208, %v204
    %v253 = vpack.c.b16 %v209, %v205
    %v254 = vpack.c.b16 %v214, %v210
    %v255 = vpack.c.b16 %v215, %v211
    %v256 = vpack.c.b16 %v216, %v212
    %v257 = vpack.c.b16 %v217, %v213
    %v258 = vpack.c.b16 %v222, %v218
    %v259 = vpack.c.b16 %v223, %v219
    %v260 = vpack.c.b16 %v224, %v220
    %v261 = vpack.c.b16 %v225, %v221
    %v262 = vpack.c.b16 %v230, %v226
    %v263 = vpack.c.b16 %v231, %v227
    %v264 = vpack.c.b16 %v232, %v228
    %v265 = vpack.c.b16 %v233, %v229
    %298 = vmatprep.subr.bf16.mxu0 %v235
    %299 = vmatpush1.bf16.msra.mxu0 %v234
    %300 = vmatprep.subr.bf16.mxu0 %v239
    %301 = vmatpush1.bf16.msra.mxu0 %v238
    %302 = vmatprep.subr.bf16.mxu0 %v243
    %303 = vmatpush1.bf16.msra.mxu0 %v242
    %304 = vmatprep.subr.bf16.mxu0 %v247
    %305 = vmatpush1.bf16.msra.mxu0 %v246
    %306 = vmatprep.subr.bf16.mxu0 %v251
    %307 = vmatpush1.bf16.msra.mxu0 %v250
    %308 = vmatprep.subr.bf16.mxu0 %v255
    %309 = vmatpush1.bf16.msra.mxu0 %v254
    %310 = vmatprep.subr.bf16.mxu0 %v259
    %311 = vmatpush1.bf16.msra.mxu0 %v258
    %312 = vmatprep.subr.bf16.mxu0 %v263
    %313 = vmatpush1.bf16.msra.mxu0 %v262
    %314 = vmatprep.subr.bf16.mxu0 0
    %315 = vmatpush1.bf16.msra.mxu0 0
    %316 = vmatprep.subr.bf16.mxu0 0
    %317 = vmatpush1.bf16.msra.mxu0 0
    %318 = vmatprep.subr.bf16.mxu0 0
    %319 = vmatpush1.bf16.msra.mxu0 0
    %320 = vmatprep.subr.bf16.mxu0 0
    %321 = vmatpush1.bf16.msra.mxu0 0
    %322 = vmatprep.subr.bf16.mxu0 0
    %323 = vmatpush1.bf16.msra.mxu0 0
    %324 = vmatprep.subr.bf16.mxu0 0
    %325 = vmatpush1.bf16.msra.mxu0 0
    %326 = vmatprep.subr.bf16.mxu0 0
    %327 = vmatpush1.bf16.msra.mxu0 0
    %328 = vmatprep.subr.bf16.mxu0 0
    %329 = vmatpush1.bf16.msra.mxu0 0
    %330 = vmatprep.mubr.bf16.mxu0 0
    %331 = vmatmul.mubr.bf16.gmra.mrb[0].mxu0 %v130
    %v332 = vpop.f32.mrb[0].mxu0
    %v333 = vadd.f32 %v97, %v332
    %v334 = vpop.f32.mrb[0].mxu0
    %v335 = vadd.f32 %v101, %v334
    %v336 = vpop.f32.mrb[0].mxu0
    %v337 = vadd.f32 %v97, %v336
    %v338 = vpop.f32.mrb[0].mxu0
    %v339 = vadd.f32 %v101, %v338
    %340 = vmatprep.mubr.bf16.mxu0 0
    %341 = vmatmul.mubr.bf16.gmra.mrb[0].mxu0 %v131
    %v342 = vpop.f32.mrb[0].mxu0
    %v343 = vadd.f32 %v97, %v342
    %v344 = vpop.f32.mrb[0].mxu0
    %v345 = vadd.f32 %v101, %v344
    %v346 = vpop.f32.mrb[0].mxu0
    %v347 = vadd.f32 %v97, %v346
    %v348 = vpop.f32.mrb[0].mxu0
    %v349 = vadd.f32 %v101, %v348
    %350 = vmatprep.mubr.bf16.mxu0 0
    %351 = vmatmul.mubr.bf16.gmra.mrb[0].mxu0 %v132
    %v352 = vpop.f32.mrb[0].mxu0
    %v353 = vadd.f32 %v97, %v352
    %v354 = vpop.f32.mrb[0].mxu0
    %v355 = vadd.f32 %v101, %v354
    %v356 = vpop.f32.mrb[0].mxu0
    %v357 = vadd.f32 %v97, %v356
    %v358 = vpop.f32.mrb[0].mxu0
    %v359 = vadd.f32 %v101, %v358
    %360 = vmatprep.mubr.bf16.mxu0 0
    %361 = vmatmul.mubr.bf16.gmra.mrb[0].mxu0 %v133
    %v362 = vpop.f32.mrb[0].mxu0
    %v363 = vadd.f32 %v97, %v362
    %v364 = vpop.f32.mrb[0].mxu0
    %v365 = vadd.f32 %v101, %v364
    %v366 = vpop.f32.mrb[0].mxu0
    %v367 = vadd.f32 %v97, %v366
    %v368 = vpop.f32.mrb[0].mxu0
    %v369 = vadd.f32 %v101, %v368
    %370 = vdwg.mxu0
    %371 = vmatprep.subr.bf16.mxu0 %v237
    %372 = vmatpush1.bf16.msra.mxu0 %v236
    %373 = vmatprep.subr.bf16.mxu0 %v241
    %374 = vmatpush1.bf16.msra.mxu0 %v240
    %375 = vmatprep.subr.bf16.mxu0 %v245
    %376 = vmatpush1.bf16.msra.mxu0 %v244
    %377 = vmatprep.subr.bf16.mxu0 %v249
    %378 = vmatpush1.bf16.msra.mxu0 %v248
    %379 = vmatprep.subr.bf16.mxu0 %v253
    %380 = vmatpush1.bf16.msra.mxu0 %v252
    %381 = vmatprep.subr.bf16.mxu0 %v257
    %382 = vmatpush1.bf16.msra.mxu0 %v256
    %383 = vmatprep.subr.bf16.mxu0 %v261
    %384 = vmatpush1.bf16.msra.mxu0 %v260
    %385 = vmatprep.subr.bf16.mxu0 %v265
    %386 = vmatpush1.bf16.msra.mxu0 %v264
    %387 = vmatprep.subr.bf16.mxu0 0
    %388 = vmatpush1.bf16.msra.mxu0 0
    %389 = vmatprep.subr.bf16.mxu0 0
    %390 = vmatpush1.bf16.msra.mxu0 0
    %391 = vmatprep.subr.bf16.mxu0 0
    %392 = vmatpush1.bf16.msra.mxu0 0
    %393 = vmatprep.subr.bf16.mxu0 0
    %394 = vmatpush1.bf16.msra.mxu0 0
    %395 = vmatprep.subr.bf16.mxu0 0
    %396 = vmatpush1.bf16.msra.mxu0 0
    %397 = vmatprep.subr.bf16.mxu0 0
    %398 = vmatpush1.bf16.msra.mxu0 0
    %399 = vmatprep.subr.bf16.mxu0 0
    %400 = vmatpush1.bf16.msra.mxu0 0
    %401 = vmatprep.subr.bf16.mxu0 0
    %402 = vmatpush1.bf16.msra.mxu0 0
    %403 = vmatprep.mubr.bf16.mxu0 0
    %404 = vmatmul.mubr.bf16.gmra.mrb[0].mxu0 %v130
    %v405 = vpop.f32.mrb[0].mxu0
    %v406 = vadd.f32 %v105, %v405
    %v407 = vpop.f32.mrb[0].mxu0
    %v408 = vadd.f32 %v109, %v407
    %v409 = vpop.f32.mrb[0].mxu0
    %v410 = vadd.f32 %v105, %v409
    %v411 = vpop.f32.mrb[0].mxu0
    %v412 = vadd.f32 %v109, %v411
    %413 = vmatprep.mubr.bf16.mxu0 0
    %414 = vmatmul.mubr.bf16.gmra.mrb[0].mxu0 %v131
    %v415 = vpop.f32.mrb[0].mxu0
    %v416 = vadd.f32 %v105, %v415
    %v417 = vpop.f32.mrb[0].mxu0
    %v418 = vadd.f32 %v109, %v417
    %v419 = vpop.f32.mrb[0].mxu0
    %v420 = vadd.f32 %v105, %v419
    %v421 = vpop.f32.mrb[0].mxu0
    %v422 = vadd.f32 %v109, %v421
    %423 = vmatprep.mubr.bf16.mxu0 0
    %424 = vmatmul.mubr.bf16.gmra.mrb[0].mxu0 %v132
    %v425 = vpop.f32.mrb[0].mxu0
    %v426 = vadd.f32 %v105, %v425
    %v427 = vpop.f32.mrb[0].mxu0
    %v428 = vadd.f32 %v109, %v427
    %v429 = vpop.f32.mrb[0].mxu0
    %v430 = vadd.f32 %v105, %v429
    %v431 = vpop.f32.mrb[0].mxu0
    %v432 = vadd.f32 %v109, %v431
    %433 = vmatprep.mubr.bf16.mxu0 0
    %434 = vmatmul.mubr.bf16.gmra.mrb[0].mxu0 %v133
    %v435 = vpop.f32.mrb[0].mxu0
    %v436 = vadd.f32 %v105, %v435
    %v437 = vpop.f32.mrb[0].mxu0
    %v438 = vadd.f32 %v109, %v437
    %v439 = vpop.f32.mrb[0].mxu0
    %v440 = vadd.f32 %v105, %v439
    %v441 = vpop.f32.mrb[0].mxu0
    %v442 = vadd.f32 %v109, %v441
    %443 = vdwg.mxu0
    %444 = vst [vmem:[#allocation2] sm:$0xff] %v333
    %445 = vst [vmem:[#allocation2 + $0x8] sm:$0xff] %v335
    %446 = vst [vmem:[#allocation2 + $0x10] sm:$0xff] %v406
    %447 = vst [vmem:[#allocation2 + $0x18] sm:$0xff] %v408
    %448 = vst [vmem:[#allocation2 + $0x20] sm:$0xff] %v337
    %449 = vst [vmem:[#allocation2 + $0x28] sm:$0xff] %v339
    %450 = vst [vmem:[#allocation2 + $0x30] sm:$0xff] %v410
    %451 = vst [vmem:[#allocation2 + $0x38] sm:$0xff] %v412
    %452 = vst [vmem:[#allocation2 + $0x40] sm:$0xff] %v343
    %453 = vst [vmem:[#allocation2 + $0x48] sm:$0xff] %v345
    %454 = vst [vmem:[#allocation2 + $0x50] sm:$0xff] %v416
    %455 = vst [vmem:[#allocation2 + $0x58] sm:$0xff] %v418
    %456 = vst [vmem:[#allocation2 + $0x60] sm:$0xff] %v347
    %457 = vst [vmem:[#allocation2 + $0x68] sm:$0xff] %v349
    %458 = vst [vmem:[#allocation2 + $0x70] sm:$0xff] %v420
    %459 = vst [vmem:[#allocation2 + $0x78] sm:$0xff] %v422
    %460 = vst [vmem:[#allocation2 + $0x80] sm:$0xff] %v353
    %461 = vst [vmem:[#allocation2 + $0x88] sm:$0xff] %v355
    %462 = vst [vmem:[#allocation2 + $0x90] sm:$0xff] %v426
    %463 = vst [vmem:[#allocation2 + $0x98] sm:$0xff] %v428
    %464 = vst [vmem:[#allocation2 + $0xa0] sm:$0xff] %v357
    %465 = vst [vmem:[#allocation2 + $0xa8] sm:$0xff] %v359
    %466 = vst [vmem:[#allocation2 + $0xb0] sm:$0xff] %v430
    %467 = vst [vmem:[#allocation2 + $0xb8] sm:$0xff] %v432
    %468 = vst [vmem:[#allocation2 + $0xc0] sm:$0xff] %v363
    %469 = vst [vmem:[#allocation2 + $0xc8] sm:$0xff] %v365
    %470 = vst [vmem:[#allocation2 + $0xd0] sm:$0xff] %v436
    %471 = vst [vmem:[#allocation2 + $0xd8] sm:$0xff] %v438
    %472 = vst [vmem:[#allocation2 + $0xe0] sm:$0xff] %v367
    %473 = vst [vmem:[#allocation2 + $0xe8] sm:$0xff] %v369
    %474 = vst [vmem:[#allocation2 + $0xf0] sm:$0xff] %v440
    %475 = vst [vmem:[#allocation2 + $0xf8] sm:$0xff] %v442
    %v476 = vld [vmem:[#allocation6] sm:$0xff]
    %v477 = vld [vmem:[#allocation6 + $0x8] sm:$0xff]
    %v478 = vld [vmem:[#allocation6 + $0x10] sm:$0xff]
    %v479 = vld [vmem:[#allocation6 + $0x18] sm:$0xff]
    %v480 = vld [vmem:[#allocation6 + $0x20] sm:$0xff]
    %v481 = vld [vmem:[#allocation6 + $0x28] sm:$0xff]
    %v482 = vld [vmem:[#allocation6 + $0x30] sm:$0xff]
    %v483 = vld [vmem:[#allocation6 + $0x38] sm:$0xff]
    %v484 = vld [vmem:[#allocation6 + $0x40] sm:$0xff]
    %v485 = vld [vmem:[#allocation6 + $0x48] sm:$0xff]
    %v486 = vld [vmem:[#allocation6 + $0x50] sm:$0xff]
    %v487 = vld [vmem:[#allocation6 + $0x58] sm:$0xff]
    %v488 = vld [vmem:[#allocation6 + $0x60] sm:$0xff]
    %v489 = vld [vmem:[#allocation6 + $0x68] sm:$0xff]
    %v490 = vld [vmem:[#allocation6 + $0x70] sm:$0xff]
    %v491 = vld [vmem:[#allocation6 + $0x78] sm:$0xff]
    %v492 = vld [vmem:[#allocation6 + $0x80] sm:$0xff]
    %v493 = vld [vmem:[#allocation6 + $0x88] sm:$0xff]
    %v494 = vld [vmem:[#allocation6 + $0x90] sm:$0xff]
    %v495 = vld [vmem:[#allocation6 + $0x98] sm:$0xff]
    %v496 = vld [vmem:[#allocation6 + $0xa0] sm:$0xff]
    %v497 = vld [vmem:[#allocation6 + $0xa8] sm:$0xff]
    %v498 = vld [vmem:[#allocation6 + $0xb0] sm:$0xff]
    %v499 = vld [vmem:[#allocation6 + $0xb8] sm:$0xff]
    %v500 = vld [vmem:[#allocation6 + $0xc0] sm:$0xff]
    %v501 = vld [vmem:[#allocation6 + $0xc8] sm:$0xff]
    %v502 = vld [vmem:[#allocation6 + $0xd0] sm:$0xff]
    %v503 = vld [vmem:[#allocation6 + $0xd8] sm:$0xff]
    %v504 = vld [vmem:[#allocation6 + $0xe0] sm:$0xff]
    %v505 = vld [vmem:[#allocation6 + $0xe8] sm:$0xff]
    %v506 = vld [vmem:[#allocation6 + $0xf0] sm:$0xff]
    %v507 = vld [vmem:[#allocation6 + $0xf8] sm:$0xff]
    %v508 = vld [vmem:[%s4] sm:$0xff]
    %v509 = vld [vmem:[#allocation3] sm:$0xff]
    %s510 = smul.u32 0, 4
    %s511 = smul.addr %s510, 8
    %s512 = scalar_lea.vmem [#allocation2], %s511
    %v513 = vld [vmem:[%s512] sm:$0xff]
    %v514 = vld [vmem:[%s512 + $0x8] sm:$0xff]
    %v515 = vld [vmem:[%s512 + $0x10] sm:$0xff]
    %v516 = vld [vmem:[%s512 + $0x18] sm:$0xff]
    %v517 = vpack.c.bf16 %v508, %v508
    %v550 = vunpack.c.l.b16 %v476
    %v551 = vunpack.c.h.b16 %v476
    %v552 = vunpack.c.l.b16 %v477
    %v553 = vunpack.c.h.b16 %v477
    %v554 = vunpack.c.l.b16 %v478
    %v555 = vunpack.c.h.b16 %v478
    %v556 = vunpack.c.l.b16 %v479
    %v557 = vunpack.c.h.b16 %v479
    %v558 = vunpack.c.l.b16 %v480
    %v559 = vunpack.c.h.b16 %v480
    %v560 = vunpack.c.l.b16 %v481
    %v561 = vunpack.c.h.b16 %v481
    %v562 = vunpack.c.l.b16 %v482
    %v563 = vunpack.c.h.b16 %v482
    %v564 = vunpack.c.l.b16 %v483
    %v565 = vunpack.c.h.b16 %v483
    %v566 = vunpack.c.l.b16 %v484
    %v567 = vunpack.c.h.b16 %v484
    %v568 = vunpack.c.l.b16 %v485
    %v569 = vunpack.c.h.b16 %v485
    %v570 = vunpack.c.l.b16 %v486
    %v571 = vunpack.c.h.b16 %v486
    %v572 = vunpack.c.l.b16 %v487
    %v573 = vunpack.c.h.b16 %v487
    %v574 = vunpack.c.l.b16 %v488
    %v575 = vunpack.c.h.b16 %v488
    %v576 = vunpack.c.l.b16 %v489
    %v577 = vunpack.c.h.b16 %v489
    %v578 = vunpack.c.l.b16 %v490
    %v579 = vunpack.c.h.b16 %v490
    %v580 = vunpack.c.l.b16 %v491
    %v581 = vunpack.c.h.b16 %v491
    %v582 = vunpack.c.l.b16 %v492
    %v583 = vunpack.c.h.b16 %v492
    %v584 = vunpack.c.l.b16 %v493
    %v585 = vunpack.c.h.b16 %v493
    %v586 = vunpack.c.l.b16 %v494
    %v587 = vunpack.c.h.b16 %v494
    %v588 = vunpack.c.l.b16 %v495
    %v589 = vunpack.c.h.b16 %v495
    %v590 = vunpack.c.l.b16 %v496
    %v591 = vunpack.c.h.b16 %v496
    %v592 = vunpack.c.l.b16 %v497
    %v593 = vunpack.c.h.b16 %v497
    %v594 = vunpack.c.l.b16 %v498
    %v595 = vunpack.c.h.b16 %v498
    %v596 = vunpack.c.l.b16 %v499
    %v597 = vunpack.c.h.b16 %v499
    %v598 = vunpack.c.l.b16 %v500
    %v599 = vunpack.c.h.b16 %v500
    %v600 = vunpack.c.l.b16 %v501
    %v601 = vunpack.c.h.b16 %v501
    %v602 = vunpack.c.l.b16 %v502
    %v603 = vunpack.c.h.b16 %v502
    %v604 = vunpack.c.l.b16 %v503
    %v605 = vunpack.c.h.b16 %v503
    %v606 = vunpack.c.l.b16 %v504
    %v607 = vunpack.c.h.b16 %v504
    %v608 = vunpack.c.l.b16 %v505
    %v609 = vunpack.c.h.b16 %v505
    %v610 = vunpack.c.l.b16 %v506
    %v611 = vunpack.c.h.b16 %v506
    %v612 = vunpack.c.l.b16 %v507
    %v613 = vunpack.c.h.b16 %v507
    %v614 = vpack.c.b16 %v554, %v550
    %v615 = vpack.c.b16 %v555, %v551
    %v616 = vpack.c.b16 %v556, %v552
    %v617 = vpack.c.b16 %v557, %v553
    %v618 = vpack.c.b16 %v562, %v558
    %v619 = vpack.c.b16 %v563, %v559
    %v620 = vpack.c.b16 %v564, %v560
    %v621 = vpack.c.b16 %v565, %v561
    %v622 = vpack.c.b16 %v570, %v566
    %v623 = vpack.c.b16 %v571, %v567
    %v624 = vpack.c.b16 %v572, %v568
    %v625 = vpack.c.b16 %v573, %v569
    %v626 = vpack.c.b16 %v578, %v574
    %v627 = vpack.c.b16 %v579, %v575
    %v628 = vpack.c.b16 %v580, %v576
    %v629 = vpack.c.b16 %v581, %v577
    %v630 = vpack.c.b16 %v586, %v582
    %v631 = vpack.c.b16 %v587, %v583
    %v632 = vpack.c.b16 %v588, %v584
    %v633 = vpack.c.b16 %v589, %v585
    %v634 = vpack.c.b16 %v594, %v590
    %v635 = vpack.c.b16 %v595, %v591
    %v636 = vpack.c.b16 %v596, %v592
    %v637 = vpack.c.b16 %v597, %v593
    %v638 = vpack.c.b16 %v602, %v598
    %v639 = vpack.c.b16 %v603, %v599
    %v640 = vpack.c.b16 %v604, %v600
    %v641 = vpack.c.b16 %v605, %v601
    %v642 = vpack.c.b16 %v610, %v606
    %v643 = vpack.c.b16 %v611, %v607
    %v644 = vpack.c.b16 %v612, %v608
    %v645 = vpack.c.b16 %v613, %v609
    %678 = vmatprep.subr.bf16.mxu0 %v615
    %679 = vmatpush1.bf16.msra.mxu0 %v614
    %680 = vmatprep.subr.bf16.mxu0 %v619
    %681 = vmatpush1.bf16.msra.mxu0 %v618
    %682 = vmatprep.subr.bf16.mxu0 %v623
    %683 = vmatpush1.bf16.msra.mxu0 %v622
    %684 = vmatprep.subr.bf16.mxu0 %v627
    %685 = vmatpush1.bf16.msra.mxu0 %v626
    %686 = vmatprep.subr.bf16.mxu0 %v631
    %687 = vmatpush1.bf16.msra.mxu0 %v630
    %688 = vmatprep.subr.bf16.mxu0 %v635
    %689 = vmatpush1.bf16.msra.mxu0 %v634
    %690 = vmatprep.subr.bf16.mxu0 %v639
    %691 = vmatpush1.bf16.msra.mxu0 %v638
    %692 = vmatprep.subr.bf16.mxu0 %v643
    %693 = vmatpush1.bf16.msra.mxu0 %v642
    %694 = vmatprep.subr.bf16.mxu0 0
    %695 = vmatpush1.bf16.msra.mxu0 0
    %696 = vmatprep.subr.bf16.mxu0 0
    %697 = vmatpush1.bf16.msra.mxu0 0
    %698 = vmatprep.subr.bf16.mxu0 0
    %699 = vmatpush1.bf16.msra.mxu0 0
    %700 = vmatprep.subr.bf16.mxu0 0
    %701 = vmatpush1.bf16.msra.mxu0 0
    %702 = vmatprep.subr.bf16.mxu0 0
    %703 = vmatpush1.bf16.msra.mxu0 0
    %704 = vmatprep.subr.bf16.mxu0 0
    %705 = vmatpush1.bf16.msra.mxu0 0
    %706 = vmatprep.subr.bf16.mxu0 0
    %707 = vmatpush1.bf16.msra.mxu0 0
    %708 = vmatprep.subr.bf16.mxu0 0
    %709 = vmatpush1.bf16.msra.mxu0 0
    %710 = vmatprep.mubr.bf16.mxu0 0
    %711 = vmatmul.mubr.bf16.gmra.mrb[0].mxu0 %v517
    %v712 = vpop.f32.mrb[0].mxu0
    %v713 = vadd.f32 0.0, %v712
    %v714 = vpop.f32.mrb[0].mxu0
    %v715 = vadd.f32 0.0, %v714
    %v716 = vpop.f32.mrb[0].mxu0
    %v717 = vpop.f32.mrb[0].mxu0
    %718 = vdwg.mxu0
    %719 = vmatprep.subr.bf16.mxu0 %v617
    %720 = vmatpush1.bf16.msra.mxu0 %v616
    %721 = vmatprep.subr.bf16.mxu0 %v621
    %722 = vmatpush1.bf16.msra.mxu0 %v620
    %723 = vmatprep.subr.bf16.mxu0 %v625
    %724 = vmatpush1.bf16.msra.mxu0 %v624
    %725 = vmatprep.subr.bf16.mxu0 %v629
    %726 = vmatpush1.bf16.msra.mxu0 %v628
    %727 = vmatprep.subr.bf16.mxu0 %v633
    %728 = vmatpush1.bf16.msra.mxu0 %v632
    %729 = vmatprep.subr.bf16.mxu0 %v637
    %730 = vmatpush1.bf16.msra.mxu0 %v636
    %731 = vmatprep.subr.bf16.mxu0 %v641
    %732 = vmatpush1.bf16.msra.mxu0 %v640
    %733 = vmatprep.subr.bf16.mxu0 %v645
    %734 = vmatpush1.bf16.msra.mxu0 %v644
    %735 = vmatprep.subr.bf16.mxu0 0
    %736 = vmatpush1.bf16.msra.mxu0 0
    %737 = vmatprep.subr.bf16.mxu0 0
    %738 = vmatpush1.bf16.msra.mxu0 0
    %739 = vmatprep.subr.bf16.mxu0 0
    %740 = vmatpush1.bf16.msra.mxu0 0
    %741 = vmatprep.subr.bf16.mxu0 0
    %742 = vmatpush1.bf16.msra.mxu0 0
    %743 = vmatprep.subr.bf16.mxu0 0
    %744 = vmatpush1.bf16.msra.mxu0 0
    %745 = vmatprep.subr.bf16.mxu0 0
    %746 = vmatpush1.bf16.msra.mxu0 0
    %747 = vmatprep.subr.bf16.mxu0 0
    %748 = vmatpush1.bf16.msra.mxu0 0
    %749 = vmatprep.subr.bf16.mxu0 0
    %750 = vmatpush1.bf16.msra.mxu0 0
    %751 = vmatprep.mubr.bf16.mxu0 0
    %752 = vmatmul.mubr.bf16.gmra.mrb[0].mxu0 %v517
    %v753 = vpop.f32.mrb[0].mxu0
    %v754 = vadd.f32 0.0, %v753
    %v755 = vpop.f32.mrb[0].mxu0
    %v756 = vadd.f32 0.0, %v755
    %v757 = vpop.f32.mrb[0].mxu0
    %v758 = vpop.f32.mrb[0].mxu0
    %759 = vdwg.mxu0
    %v760 = vadd.f32 %v513, %v713
    %v761 = vadd.f32 %v514, %v715
    %v762 = vadd.f32 %v515, %v754
    %v763 = vadd.f32 %v516, %v756
    %v764 = vxor.u32 %v760, 2147483648
    %v765 = vxor.u32 %v761, 2147483648
    %v766 = vxor.u32 %v762, 2147483648
    %v767 = vmul.f32 %v764, 1.442695
    %v768 = vpow.pop %v767
    %v769 = vmul.f32 %v765, 1.442695
    %v770 = vpow.pop %v769
    %v771 = vmul.f32 %v766, 1.442695
    %v772 = vpow.pop %v771
    %v773 = vadd.f32 %v768, 1.0
    %v774 = vadd.f32 %v770, 1.0
    %v775 = vadd.f32 %v772, 1.0
    %v776 = vrcp.pop %v773
    %v777 = vmul.f32 1.0, %v776
    %v778 = vrcp.pop %v774
    %v779 = vmul.f32 1.0, %v778
    %v780 = vrcp.pop %v775
    %v781 = vmul.f32 1.0, %v780
    %v782 = vtanh.pop %v763
    %v783 = vmul.f32 %v779, %v509
    %v784 = vmul.f32 %v777, %v782
    %v785 = vadd.f32 %v783, %v784
    %v786 = vtanh.pop %v785
    %v787 = vmul.f32 %v781, %v786
    %s788 = smul.u32 1, 4
    %s789 = smul.addr %s788, 8
    %s790 = scalar_lea.vmem [#allocation2], %s789
    %v791 = vld [vmem:[%s790] sm:$0xff]
    %v792 = vld [vmem:[%s790 + $0x8] sm:$0xff]
    %v793 = vld [vmem:[%s790 + $0x10] sm:$0xff]
    %v794 = vld [vmem:[%s790 + $0x18] sm:$0xff]
    %v795 = vpack.c.bf16 %v787, %v787
    %796 = vmatprep.subr.bf16.mxu0 %v615
    %797 = vmatpush1.bf16.msra.mxu0 %v614
    %798 = vmatprep.subr.bf16.mxu0 %v619
    %799 = vmatpush1.bf16.msra.mxu0 %v618
    %800 = vmatprep.subr.bf16.mxu0 %v623
    %801 = vmatpush1.bf16.msra.mxu0 %v622
    %802 = vmatprep.subr.bf16.mxu0 %v627
    %803 = vmatpush1.bf16.msra.mxu0 %v626
    %804 = vmatprep.subr.bf16.mxu0 %v631
    %805 = vmatpush1.bf16.msra.mxu0 %v630
    %806 = vmatprep.subr.bf16.mxu0 %v635
    %807 = vmatpush1.bf16.msra.mxu0 %v634
    %808 = vmatprep.subr.bf16.mxu0 %v639
    %809 = vmatpush1.bf16.msra.mxu0 %v638
    %810 = vmatprep.subr.bf16.mxu0 %v643
    %811 = vmatpush1.bf16.msra.mxu0 %v642
    %812 = vmatprep.subr.bf16.mxu0 0
    %813 = vmatpush1.bf16.msra.mxu0 0
    %814 = vmatprep.subr.bf16.mxu0 0
    %815 = vmatpush1.bf16.msra.mxu0 0
    %816 = vmatprep.subr.bf16.mxu0 0
    %817 = vmatpush1.bf16.msra.mxu0 0
    %818 = vmatprep.subr.bf16.mxu0 0
    %819 = vmatpush1.bf16.msra.mxu0 0
    %820 = vmatprep.subr.bf16.mxu0 0
    %821 = vmatpush1.bf16.msra.mxu0 0
    %822 = vmatprep.subr.bf16.mxu0 0
    %823 = vmatpush1.bf16.msra.mxu0 0
    %824 = vmatprep.subr.bf16.mxu0 0
    %825 = vmatpush1.bf16.msra.mxu0 0
    %826 = vmatprep.subr.bf16.mxu0 0
    %827 = vmatpush1.bf16.msra.mxu0 0
    %828 = vmatprep.mubr.bf16.mxu0 0
    %829 = vmatmul.mubr.bf16.gmra.mrb[0].mxu0 %v795
    %v830 = vpop.f32.mrb[0].mxu0
    %v831 = vadd.f32 0.0, %v830
    %v832 = vpop.f32.mrb[0].mxu0
    %v833 = vadd.f32 0.0, %v832
    %v834 = vpop.f32.mrb[0].mxu0
    %v835 = vpop.f32.mrb[0].mxu0
    %836 = vdwg.mxu0
    %837 = vmatprep.subr.bf16.mxu0 %v617
    %838 = vmatpush1.bf16.msra.mxu0 %v616
    %839 = vmatprep.subr.bf16.mxu0 %v621
    %840 = vmatpush1.bf16.msra.mxu0 %v620
    %841 = vmatprep.subr.bf16.mxu0 %v625
    %842 = vmatpush1.bf16.msra.mxu0 %v624
    %843 = vmatprep.subr.bf16.mxu0 %v629
    %844 = vmatpush1.bf16.msra.mxu0 %v628
    %845 = vmatprep.subr.bf16.mxu0 %v633
    %846 = vmatpush1.bf16.msra.mxu0 %v632
    %847 = vmatprep.subr.bf16.mxu0 %v637
    %848 = vmatpush1.bf16.msra.mxu0 %v636
    %849 = vmatprep.subr.bf16.mxu0 %v641
    %850 = vmatpush1.bf16.msra.mxu0 %v640
    %851 = vmatprep.subr.bf16.mxu0 %v645
    %852 = vmatpush1.bf16.msra.mxu0 %v644
    %853 = vmatprep.subr.bf16.mxu0 0
    %854 = vmatpush1.bf16.msra.mxu0 0
    %855 = vmatprep.subr.bf16.mxu0 0
    %856 = vmatpush1.bf16.msra.mxu0 0
    %857 = vmatprep.subr.bf16.mxu0 0
    %858 = vmatpush1.bf16.msra.mxu0 0
    %859 = vmatprep.subr.bf16.mxu0 0
    %860 = vmatpush1.bf16.msra.mxu0 0
    %861 = vmatprep.subr.bf16.mxu0 0
    %862 = vmatpush1.bf16.msra.mxu0 0
    %863 = vmatprep.subr.bf16.mxu0 0
    %864 = vmatpush1.bf16.msra.mxu0 0
    %865 = vmatprep.subr.bf16.mxu0 0
    %866 = vmatpush1.bf16.msra.mxu0 0
    %867 = vmatprep.subr.bf16.mxu0 0
    %868 = vmatpush1.bf16.msra.mxu0 0
    %869 = vmatprep.mubr.bf16.mxu0 0
    %870 = vmatmul.mubr.bf16.gmra.mrb[0].mxu0 %v795
    %v871 = vpop.f32.mrb[0].mxu0
    %v872 = vadd.f32 0.0, %v871
    %v873 = vpop.f32.mrb[0].mxu0
    %v874 = vadd.f32 0.0, %v873
    %v875 = vpop.f32.mrb[0].mxu0
    %v876 = vpop.f32.mrb[0].mxu0
    %877 = vdwg.mxu0
    %v878 = vadd.f32 %v791, %v831
    %v879 = vadd.f32 %v792, %v833
    %v880 = vadd.f32 %v793, %v872
    %v881 = vadd.f32 %v794, %v874
    %v882 = vxor.u32 %v878, 2147483648
    %v883 = vxor.u32 %v879, 2147483648
    %v884 = vxor.u32 %v880, 2147483648
    %v885 = vmul.f32 %v882, 1.442695
    %v886 = vpow.pop %v885
    %v887 = vmul.f32 %v883, 1.442695
    %v888 = vpow.pop %v887
    %v889 = vmul.f32 %v884, 1.442695
    %v890 = vpow.pop %v889
    %v891 = vadd.f32 %v886, 1.0
    %v892 = vadd.f32 %v888, 1.0
    %v893 = vadd.f32 %v890, 1.0
    %v894 = vrcp.pop %v891
    %v895 = vmul.f32 1.0, %v894
    %v896 = vrcp.pop %v892
    %v897 = vmul.f32 1.0, %v896
    %v898 = vrcp.pop %v893
    %v899 = vmul.f32 1.0, %v898
    %v900 = vtanh.pop %v881
    %v901 = vmul.f32 %v897, %v785
    %v902 = vmul.f32 %v895, %v900
    %v903 = vadd.f32 %v901, %v902
    %v904 = vtanh.pop %v903
    %v905 = vmul.f32 %v899, %v904
    %s906 = smul.u32 2, 4
    %s907 = smul.addr %s906, 8
    %s908 = scalar_lea.vmem [#allocation2], %s907
    %v909 = vld [vmem:[%s908] sm:$0xff]
    %v910 = vld [vmem:[%s908 + $0x8] sm:$0xff]
    %v911 = vld [vmem:[%s908 + $0x10] sm:$0xff]
    %v912 = vld [vmem:[%s908 + $0x18] sm:$0xff]
    %v913 = vpack.c.bf16 %v905, %v905
    %914 = vmatprep.subr.bf16.mxu0 %v615
    %915 = vmatpush1.bf16.msra.mxu0 %v614
    %916 = vmatprep.subr.bf16.mxu0 %v619
    %917 = vmatpush1.bf16.msra.mxu0 %v618
    %918 = vmatprep.subr.bf16.mxu0 %v623
    %919 = vmatpush1.bf16.msra.mxu0 %v622
    %920 = vmatprep.subr.bf16.mxu0 %v627
    %921 = vmatpush1.bf16.msra.mxu0 %v626
    %922 = vmatprep.subr.bf16.mxu0 %v631
    %923 = vmatpush1.bf16.msra.mxu0 %v630
    %924 = vmatprep.subr.bf16.mxu0 %v635
    %925 = vmatpush1.bf16.msra.mxu0 %v634
    %926 = vmatprep.subr.bf16.mxu0 %v639
    %927 = vmatpush1.bf16.msra.mxu0 %v638
    %928 = vmatprep.subr.bf16.mxu0 %v643
    %929 = vmatpush1.bf16.msra.mxu0 %v642
    %930 = vmatprep.subr.bf16.mxu0 0
    %931 = vmatpush1.bf16.msra.mxu0 0
    %932 = vmatprep.subr.bf16.mxu0 0
    %933 = vmatpush1.bf16.msra.mxu0 0
    %934 = vmatprep.subr.bf16.mxu0 0
    %935 = vmatpush1.bf16.msra.mxu0 0
    %936 = vmatprep.subr.bf16.mxu0 0
    %937 = vmatpush1.bf16.msra.mxu0 0
    %938 = vmatprep.subr.bf16.mxu0 0
    %939 = vmatpush1.bf16.msra.mxu0 0
    %940 = vmatprep.subr.bf16.mxu0 0
    %941 = vmatpush1.bf16.msra.mxu0 0
    %942 = vmatprep.subr.bf16.mxu0 0
    %943 = vmatpush1.bf16.msra.mxu0 0
    %944 = vmatprep.subr.bf16.mxu0 0
    %945 = vmatpush1.bf16.msra.mxu0 0
    %946 = vmatprep.mubr.bf16.mxu0 0
    %947 = vmatmul.mubr.bf16.gmra.mrb[0].mxu0 %v913
    %v948 = vpop.f32.mrb[0].mxu0
    %v949 = vadd.f32 0.0, %v948
    %v950 = vpop.f32.mrb[0].mxu0
    %v951 = vadd.f32 0.0, %v950
    %v952 = vpop.f32.mrb[0].mxu0
    %v953 = vpop.f32.mrb[0].mxu0
    %954 = vdwg.mxu0
    %955 = vmatprep.subr.bf16.mxu0 %v617
    %956 = vmatpush1.bf16.msra.mxu0 %v616
    %957 = vmatprep.subr.bf16.mxu0 %v621
    %958 = vmatpush1.bf16.msra.mxu0 %v620
    %959 = vmatprep.subr.bf16.mxu0 %v625
    %960 = vmatpush1.bf16.msra.mxu0 %v624
    %961 = vmatprep.subr.bf16.mxu0 %v629
    %962 = vmatpush1.bf16.msra.mxu0 %v628
    %963 = vmatprep.subr.bf16.mxu0 %v633
    %964 = vmatpush1.bf16.msra.mxu0 %v632
    %965 = vmatprep.subr.bf16.mxu0 %v637
    %966 = vmatpush1.bf16.msra.mxu0 %v636
    %967 = vmatprep.subr.bf16.mxu0 %v641
    %968 = vmatpush1.bf16.msra.mxu0 %v640
    %969 = vmatprep.subr.bf16.mxu0 %v645
    %970 = vmatpush1.bf16.msra.mxu0 %v644
    %971 = vmatprep.subr.bf16.mxu0 0
    %972 = vmatpush1.bf16.msra.mxu0 0
    %973 = vmatprep.subr.bf16.mxu0 0
    %974 = vmatpush1.bf16.msra.mxu0 0
    %975 = vmatprep.subr.bf16.mxu0 0
    %976 = vmatpush1.bf16.msra.mxu0 0
    %977 = vmatprep.subr.bf16.mxu0 0
    %978 = vmatpush1.bf16.msra.mxu0 0
    %979 = vmatprep.subr.bf16.mxu0 0
    %980 = vmatpush1.bf16.msra.mxu0 0
    %981 = vmatprep.subr.bf16.mxu0 0
    %982 = vmatpush1.bf16.msra.mxu0 0
    %983 = vmatprep.subr.bf16.mxu0 0
    %984 = vmatpush1.bf16.msra.mxu0 0
    %985 = vmatprep.subr.bf16.mxu0 0
    %986 = vmatpush1.bf16.msra.mxu0 0
    %987 = vmatprep.mubr.bf16.mxu0 0
    %988 = vmatmul.mubr.bf16.gmra.mrb[0].mxu0 %v913
    %v989 = vpop.f32.mrb[0].mxu0
    %v990 = vadd.f32 0.0, %v989
    %v991 = vpop.f32.mrb[0].mxu0
    %v992 = vadd.f32 0.0, %v991
    %v993 = vpop.f32.mrb[0].mxu0
    %v994 = vpop.f32.mrb[0].mxu0
    %995 = vdwg.mxu0
    %v996 = vadd.f32 %v909, %v949
    %v997 = vadd.f32 %v910, %v951
    %v998 = vadd.f32 %v911, %v990
    %v999 = vadd.f32 %v912, %v992
    %v1000 = vxor.u32 %v996, 2147483648
    %v1001 = vxor.u32 %v997, 2147483648
    %v1002 = vxor.u32 %v998, 2147483648
    %v1003 = vmul.f32 %v1000, 1.442695
    %v1004 = vpow.pop %v1003
    %v1005 = vmul.f32 %v1001, 1.442695
    %v1006 = vpow.pop %v1005
    %v1007 = vmul.f32 %v1002, 1.442695
    %v1008 = vpow.pop %v1007
    %v1009 = vadd.f32 %v1004, 1.0
    %v1010 = vadd.f32 %v1006, 1.0
    %v1011 = vadd.f32 %v1008, 1.0
    %v1012 = vrcp.pop %v1009
    %v1013 = vmul.f32 1.0, %v1012
    %v1014 = vrcp.pop %v1010
    %v1015 = vmul.f32 1.0, %v1014
    %v1016 = vrcp.pop %v1011
    %v1017 = vmul.f32 1.0, %v1016
    %v1018 = vtanh.pop %v999
    %v1019 = vmul.f32 %v1015, %v903
    %v1020 = vmul.f32 %v1013, %v1018
    %v1021 = vadd.f32 %v1019, %v1020
    %v1022 = vtanh.pop %v1021
    %v1023 = vmul.f32 %v1017, %v1022
    %s1024 = smul.u32 3, 4
    %s1025 = smul.addr %s1024, 8
    %s1026 = scalar_lea.vmem [#allocation2], %s1025
    %v1027 = vld [vmem:[%s1026] sm:$0xff]
    %v1028 = vld [vmem:[%s1026 + $0x8] sm:$0xff]
    %v1029 = vld [vmem:[%s1026 + $0x10] sm:$0xff]
    %v1030 = vld [vmem:[%s1026 + $0x18] sm:$0xff]
    %v1031 = vpack.c.bf16 %v1023, %v1023
    %1032 = vmatprep.subr.bf16.mxu0 %v615
    %1033 = vmatpush1.bf16.msra.mxu0 %v614
    %1034 = vmatprep.subr.bf16.mxu0 %v619
    %1035 = vmatpush1.bf16.msra.mxu0 %v618
    %1036 = vmatprep.subr.bf16.mxu0 %v623
    %1037 = vmatpush1.bf16.msra.mxu0 %v622
    %1038 = vmatprep.subr.bf16.mxu0 %v627
    %1039 = vmatpush1.bf16.msra.mxu0 %v626
    %1040 = vmatprep.subr.bf16.mxu0 %v631
    %1041 = vmatpush1.bf16.msra.mxu0 %v630
    %1042 = vmatprep.subr.bf16.mxu0 %v635
    %1043 = vmatpush1.bf16.msra.mxu0 %v634
    %1044 = vmatprep.subr.bf16.mxu0 %v639
    %1045 = vmatpush1.bf16.msra.mxu0 %v638
    %1046 = vmatprep.subr.bf16.mxu0 %v643
    %1047 = vmatpush1.bf16.msra.mxu0 %v642
    %1048 = vmatprep.subr.bf16.mxu0 0
    %1049 = vmatpush1.bf16.msra.mxu0 0
    %1050 = vmatprep.subr.bf16.mxu0 0
    %1051 = vmatpush1.bf16.msra.mxu0 0
    %1052 = vmatprep.subr.bf16.mxu0 0
    %1053 = vmatpush1.bf16.msra.mxu0 0
    %1054 = vmatprep.subr.bf16.mxu0 0
    %1055 = vmatpush1.bf16.msra.mxu0 0
    %1056 = vmatprep.subr.bf16.mxu0 0
    %1057 = vmatpush1.bf16.msra.mxu0 0
    %1058 = vmatprep.subr.bf16.mxu0 0
    %1059 = vmatpush1.bf16.msra.mxu0 0
    %1060 = vmatprep.subr.bf16.mxu0 0
    %1061 = vmatpush1.bf16.msra.mxu0 0
    %1062 = vmatprep.subr.bf16.mxu0 0
    %1063 = vmatpush1.bf16.msra.mxu0 0
    %1064 = vmatprep.mubr.bf16.mxu0 0
    %1065 = vmatmul.mubr.bf16.gmra.mrb[0].mxu0 %v1031
    %v1066 = vpop.f32.mrb[0].mxu0
    %v1067 = vadd.f32 0.0, %v1066
    %v1068 = vpop.f32.mrb[0].mxu0
    %v1069 = vadd.f32 0.0, %v1068
    %v1070 = vpop.f32.mrb[0].mxu0
    %v1071 = vpop.f32.mrb[0].mxu0
    %1072 = vdwg.mxu0
    %1073 = vmatprep.subr.bf16.mxu0 %v617
    %1074 = vmatpush1.bf16.msra.mxu0 %v616
    %1075 = vmatprep.subr.bf16.mxu0 %v621
    %1076 = vmatpush1.bf16.msra.mxu0 %v620
    %1077 = vmatprep.subr.bf16.mxu0 %v625
    %1078 = vmatpush1.bf16.msra.mxu0 %v624
    %1079 = vmatprep.subr.bf16.mxu0 %v629
    %1080 = vmatpush1.bf16.msra.mxu0 %v628
    %1081 = vmatprep.subr.bf16.mxu0 %v633
    %1082 = vmatpush1.bf16.msra.mxu0 %v632
    %1083 = vmatprep.subr.bf16.mxu0 %v637
    %1084 = vmatpush1.bf16.msra.mxu0 %v636
    %1085 = vmatprep.subr.bf16.mxu0 %v641
    %1086 = vmatpush1.bf16.msra.mxu0 %v640
    %1087 = vmatprep.subr.bf16.mxu0 %v645
    %1088 = vmatpush1.bf16.msra.mxu0 %v644
    %1089 = vmatprep.subr.bf16.mxu0 0
    %1090 = vmatpush1.bf16.msra.mxu0 0
    %1091 = vmatprep.subr.bf16.mxu0 0
    %1092 = vmatpush1.bf16.msra.mxu0 0
    %1093 = vmatprep.subr.bf16.mxu0 0
    %1094 = vmatpush1.bf16.msra.mxu0 0
    %1095 = vmatprep.subr.bf16.mxu0 0
    %1096 = vmatpush1.bf16.msra.mxu0 0
    %1097 = vmatprep.subr.bf16.mxu0 0
    %1098 = vmatpush1.bf16.msra.mxu0 0
    %1099 = vmatprep.subr.bf16.mxu0 0
    %1100 = vmatpush1.bf16.msra.mxu0 0
    %1101 = vmatprep.subr.bf16.mxu0 0
    %1102 = vmatpush1.bf16.msra.mxu0 0
    %1103 = vmatprep.subr.bf16.mxu0 0
    %1104 = vmatpush1.bf16.msra.mxu0 0
    %1105 = vmatprep.mubr.bf16.mxu0 0
    %1106 = vmatmul.mubr.bf16.gmra.mrb[0].mxu0 %v1031
    %v1107 = vpop.f32.mrb[0].mxu0
    %v1108 = vadd.f32 0.0, %v1107
    %v1109 = vpop.f32.mrb[0].mxu0
    %v1110 = vadd.f32 0.0, %v1109
    %v1111 = vpop.f32.mrb[0].mxu0
    %v1112 = vpop.f32.mrb[0].mxu0
    %1113 = vdwg.mxu0
    %v1114 = vadd.f32 %v1027, %v1067
    %v1115 = vadd.f32 %v1028, %v1069
    %v1116 = vadd.f32 %v1029, %v1108
    %v1117 = vadd.f32 %v1030, %v1110
    %v1118 = vxor.u32 %v1114, 2147483648
    %v1119 = vxor.u32 %v1115, 2147483648
    %v1120 = vxor.u32 %v1116, 2147483648
    %v1121 = vmul.f32 %v1118, 1.442695
    %v1122 = vpow.pop %v1121
    %v1123 = vmul.f32 %v1119, 1.442695
    %v1124 = vpow.pop %v1123
    %v1125 = vmul.f32 %v1120, 1.442695
    %v1126 = vpow.pop %v1125
    %v1127 = vadd.f32 %v1122, 1.0
    %v1128 = vadd.f32 %v1124, 1.0
    %v1129 = vadd.f32 %v1126, 1.0
    %v1130 = vrcp.pop %v1127
    %v1131 = vmul.f32 1.0, %v1130
    %v1132 = vrcp.pop %v1128
    %v1133 = vmul.f32 1.0, %v1132
    %v1134 = vrcp.pop %v1129
    %v1135 = vmul.f32 1.0, %v1134
    %v1136 = vtanh.pop %v1117
    %v1137 = vmul.f32 %v1133, %v1021
    %v1138 = vmul.f32 %v1131, %v1136
    %v1139 = vadd.f32 %v1137, %v1138
    %v1140 = vtanh.pop %v1139
    %v1141 = vmul.f32 %v1135, %v1140
    %s1142 = smul.u32 4, 4
    %s1143 = smul.addr %s1142, 8
    %s1144 = scalar_lea.vmem [#allocation2], %s1143
    %v1145 = vld [vmem:[%s1144] sm:$0xff]
    %v1146 = vld [vmem:[%s1144 + $0x8] sm:$0xff]
    %v1147 = vld [vmem:[%s1144 + $0x10] sm:$0xff]
    %v1148 = vld [vmem:[%s1144 + $0x18] sm:$0xff]
    %v1149 = vpack.c.bf16 %v1141, %v1141
    %1150 = vmatprep.subr.bf16.mxu0 %v615
    %1151 = vmatpush1.bf16.msra.mxu0 %v614
    %1152 = vmatprep.subr.bf16.mxu0 %v619
    %1153 = vmatpush1.bf16.msra.mxu0 %v618
    %1154 = vmatprep.subr.bf16.mxu0 %v623
    %1155 = vmatpush1.bf16.msra.mxu0 %v622
    %1156 = vmatprep.subr.bf16.mxu0 %v627
    %1157 = vmatpush1.bf16.msra.mxu0 %v626
    %1158 = vmatprep.subr.bf16.mxu0 %v631
    %1159 = vmatpush1.bf16.msra.mxu0 %v630
    %1160 = vmatprep.subr.bf16.mxu0 %v635
    %1161 = vmatpush1.bf16.msra.mxu0 %v634
    %1162 = vmatprep.subr.bf16.mxu0 %v639
    %1163 = vmatpush1.bf16.msra.mxu0 %v638
    %1164 = vmatprep.subr.bf16.mxu0 %v643
    %1165 = vmatpush1.bf16.msra.mxu0 %v642
    %1166 = vmatprep.subr.bf16.mxu0 0
    %1167 = vmatpush1.bf16.msra.mxu0 0
    %1168 = vmatprep.subr.bf16.mxu0 0
    %1169 = vmatpush1.bf16.msra.mxu0 0
    %1170 = vmatprep.subr.bf16.mxu0 0
    %1171 = vmatpush1.bf16.msra.mxu0 0
    %1172 = vmatprep.subr.bf16.mxu0 0
    %1173 = vmatpush1.bf16.msra.mxu0 0
    %1174 = vmatprep.subr.bf16.mxu0 0
    %1175 = vmatpush1.bf16.msra.mxu0 0
    %1176 = vmatprep.subr.bf16.mxu0 0
    %1177 = vmatpush1.bf16.msra.mxu0 0
    %1178 = vmatprep.subr.bf16.mxu0 0
    %1179 = vmatpush1.bf16.msra.mxu0 0
    %1180 = vmatprep.subr.bf16.mxu0 0
    %1181 = vmatpush1.bf16.msra.mxu0 0
    %1182 = vmatprep.mubr.bf16.mxu0 0
    %1183 = vmatmul.mubr.bf16.gmra.mrb[0].mxu0 %v1149
    %v1184 = vpop.f32.mrb[0].mxu0
    %v1185 = vadd.f32 0.0, %v1184
    %v1186 = vpop.f32.mrb[0].mxu0
    %v1187 = vadd.f32 0.0, %v1186
    %v1188 = vpop.f32.mrb[0].mxu0
    %v1189 = vpop.f32.mrb[0].mxu0
    %1190 = vdwg.mxu0
    %1191 = vmatprep.subr.bf16.mxu0 %v617
    %1192 = vmatpush1.bf16.msra.mxu0 %v616
    %1193 = vmatprep.subr.bf16.mxu0 %v621
    %1194 = vmatpush1.bf16.msra.mxu0 %v620
    %1195 = vmatprep.subr.bf16.mxu0 %v625
    %1196 = vmatpush1.bf16.msra.mxu0 %v624
    %1197 = vmatprep.subr.bf16.mxu0 %v629
    %1198 = vmatpush1.bf16.msra.mxu0 %v628
    %1199 = vmatprep.subr.bf16.mxu0 %v633
    %1200 = vmatpush1.bf16.msra.mxu0 %v632
    %1201 = vmatprep.subr.bf16.mxu0 %v637
    %1202 = vmatpush1.bf16.msra.mxu0 %v636
    %1203 = vmatprep.subr.bf16.mxu0 %v641
    %1204 = vmatpush1.bf16.msra.mxu0 %v640
    %1205 = vmatprep.subr.bf16.mxu0 %v645
    %1206 = vmatpush1.bf16.msra.mxu0 %v644
    %1207 = vmatprep.subr.bf16.mxu0 0
    %1208 = vmatpush1.bf16.msra.mxu0 0
    %1209 = vmatprep.subr.bf16.mxu0 0
    %1210 = vmatpush1.bf16.msra.mxu0 0
    %1211 = vmatprep.subr.bf16.mxu0 0
    %1212 = vmatpush1.bf16.msra.mxu0 0
    %1213 = vmatprep.subr.bf16.mxu0 0
    %1214 = vmatpush1.bf16.msra.mxu0 0
    %1215 = vmatprep.subr.bf16.mxu0 0
    %1216 = vmatpush1.bf16.msra.mxu0 0
    %1217 = vmatprep.subr.bf16.mxu0 0
    %1218 = vmatpush1.bf16.msra.mxu0 0
    %1219 = vmatprep.subr.bf16.mxu0 0
    %1220 = vmatpush1.bf16.msra.mxu0 0
    %1221 = vmatprep.subr.bf16.mxu0 0
    %1222 = vmatpush1.bf16.msra.mxu0 0
    %1223 = vmatprep.mubr.bf16.mxu0 0
    %1224 = vmatmul.mubr.bf16.gmra.mrb[0].mxu0 %v1149
    %v1225 = vpop.f32.mrb[0].mxu0
    %v1226 = vadd.f32 0.0, %v1225
    %v1227 = vpop.f32.mrb[0].mxu0
    %v1228 = vadd.f32 0.0, %v1227
    %v1229 = vpop.f32.mrb[0].mxu0
    %v1230 = vpop.f32.mrb[0].mxu0
    %1231 = vdwg.mxu0
    %v1232 = vadd.f32 %v1145, %v1185
    %v1233 = vadd.f32 %v1146, %v1187
    %v1234 = vadd.f32 %v1147, %v1226
    %v1235 = vadd.f32 %v1148, %v1228
    %v1236 = vxor.u32 %v1232, 2147483648
    %v1237 = vxor.u32 %v1233, 2147483648
    %v1238 = vxor.u32 %v1234, 2147483648
    %v1239 = vmul.f32 %v1236, 1.442695
    %v1240 = vpow.pop %v1239
    %v1241 = vmul.f32 %v1237, 1.442695
    %v1242 = vpow.pop %v1241
    %v1243 = vmul.f32 %v1238, 1.442695
    %v1244 = vpow.pop %v1243
    %v1245 = vadd.f32 %v1240, 1.0
    %v1246 = vadd.f32 %v1242, 1.0
    %v1247 = vadd.f32 %v1244, 1.0
    %v1248 = vrcp.pop %v1245
    %v1249 = vmul.f32 1.0, %v1248
    %v1250 = vrcp.pop %v1246
    %v1251 = vmul.f32 1.0, %v1250
    %v1252 = vrcp.pop %v1247
    %v1253 = vmul.f32 1.0, %v1252
    %v1254 = vtanh.pop %v1235
    %v1255 = vmul.f32 %v1251, %v1139
    %v1256 = vmul.f32 %v1249, %v1254
    %v1257 = vadd.f32 %v1255, %v1256
    %v1258 = vtanh.pop %v1257
    %v1259 = vmul.f32 %v1253, %v1258
    %s1260 = smul.u32 5, 4
    %s1261 = smul.addr %s1260, 8
    %s1262 = scalar_lea.vmem [#allocation2], %s1261
    %v1263 = vld [vmem:[%s1262] sm:$0xff]
    %v1264 = vld [vmem:[%s1262 + $0x8] sm:$0xff]
    %v1265 = vld [vmem:[%s1262 + $0x10] sm:$0xff]
    %v1266 = vld [vmem:[%s1262 + $0x18] sm:$0xff]
    %v1267 = vpack.c.bf16 %v1259, %v1259
    %1268 = vmatprep.subr.bf16.mxu0 %v615
    %1269 = vmatpush1.bf16.msra.mxu0 %v614
    %1270 = vmatprep.subr.bf16.mxu0 %v619
    %1271 = vmatpush1.bf16.msra.mxu0 %v618
    %1272 = vmatprep.subr.bf16.mxu0 %v623
    %1273 = vmatpush1.bf16.msra.mxu0 %v622
    %1274 = vmatprep.subr.bf16.mxu0 %v627
    %1275 = vmatpush1.bf16.msra.mxu0 %v626
    %1276 = vmatprep.subr.bf16.mxu0 %v631
    %1277 = vmatpush1.bf16.msra.mxu0 %v630
    %1278 = vmatprep.subr.bf16.mxu0 %v635
    %1279 = vmatpush1.bf16.msra.mxu0 %v634
    %1280 = vmatprep.subr.bf16.mxu0 %v639
    %1281 = vmatpush1.bf16.msra.mxu0 %v638
    %1282 = vmatprep.subr.bf16.mxu0 %v643
    %1283 = vmatpush1.bf16.msra.mxu0 %v642
    %1284 = vmatprep.subr.bf16.mxu0 0
    %1285 = vmatpush1.bf16.msra.mxu0 0
    %1286 = vmatprep.subr.bf16.mxu0 0
    %1287 = vmatpush1.bf16.msra.mxu0 0
    %1288 = vmatprep.subr.bf16.mxu0 0
    %1289 = vmatpush1.bf16.msra.mxu0 0
    %1290 = vmatprep.subr.bf16.mxu0 0
    %1291 = vmatpush1.bf16.msra.mxu0 0
    %1292 = vmatprep.subr.bf16.mxu0 0
    %1293 = vmatpush1.bf16.msra.mxu0 0
    %1294 = vmatprep.subr.bf16.mxu0 0
    %1295 = vmatpush1.bf16.msra.mxu0 0
    %1296 = vmatprep.subr.bf16.mxu0 0
    %1297 = vmatpush1.bf16.msra.mxu0 0
    %1298 = vmatprep.subr.bf16.mxu0 0
    %1299 = vmatpush1.bf16.msra.mxu0 0
    %1300 = vmatprep.mubr.bf16.mxu0 0
    %1301 = vmatmul.mubr.bf16.gmra.mrb[0].mxu0 %v1267
    %v1302 = vpop.f32.mrb[0].mxu0
    %v1303 = vadd.f32 0.0, %v1302
    %v1304 = vpop.f32.mrb[0].mxu0
    %v1305 = vadd.f32 0.0, %v1304
    %v1306 = vpop.f32.mrb[0].mxu0
    %v1307 = vpop.f32.mrb[0].mxu0
    %1308 = vdwg.mxu0
    %1309 = vmatprep.subr.bf16.mxu0 %v617
    %1310 = vmatpush1.bf16.msra.mxu0 %v616
    %1311 = vmatprep.subr.bf16.mxu0 %v621
    %1312 = vmatpush1.bf16.msra.mxu0 %v620
    %1313 = vmatprep.subr.bf16.mxu0 %v625
    %1314 = vmatpush1.bf16.msra.mxu0 %v624
    %1315 = vmatprep.subr.bf16.mxu0 %v629
    %1316 = vmatpush1.bf16.msra.mxu0 %v628
    %1317 = vmatprep.subr.bf16.mxu0 %v633
    %1318 = vmatpush1.bf16.msra.mxu0 %v632
    %1319 = vmatprep.subr.bf16.mxu0 %v637
    %1320 = vmatpush1.bf16.msra.mxu0 %v636
    %1321 = vmatprep.subr.bf16.mxu0 %v641
    %1322 = vmatpush1.bf16.msra.mxu0 %v640
    %1323 = vmatprep.subr.bf16.mxu0 %v645
    %1324 = vmatpush1.bf16.msra.mxu0 %v644
    %1325 = vmatprep.subr.bf16.mxu0 0
    %1326 = vmatpush1.bf16.msra.mxu0 0
    %1327 = vmatprep.subr.bf16.mxu0 0
    %1328 = vmatpush1.bf16.msra.mxu0 0
    %1329 = vmatprep.subr.bf16.mxu0 0
    %1330 = vmatpush1.bf16.msra.mxu0 0
    %1331 = vmatprep.subr.bf16.mxu0 0
    %1332 = vmatpush1.bf16.msra.mxu0 0
    %1333 = vmatprep.subr.bf16.mxu0 0
    %1334 = vmatpush1.bf16.msra.mxu0 0
    %1335 = vmatprep.subr.bf16.mxu0 0
    %1336 = vmatpush1.bf16.msra.mxu0 0
    %1337 = vmatprep.subr.bf16.mxu0 0
    %1338 = vmatpush1.bf16.msra.mxu0 0
    %1339 = vmatprep.subr.bf16.mxu0 0
    %1340 = vmatpush1.bf16.msra.mxu0 0
    %1341 = vmatprep.mubr.bf16.mxu0 0
    %1342 = vmatmul.mubr.bf16.gmra.mrb[0].mxu0 %v1267
    %v1343 = vpop.f32.mrb[0].mxu0
    %v1344 = vadd.f32 0.0, %v1343
    %v1345 = vpop.f32.mrb[0].mxu0
    %v1346 = vadd.f32 0.0, %v1345
    %v1347 = vpop.f32.mrb[0].mxu0
    %v1348 = vpop.f32.mrb[0].mxu0
    %1349 = vdwg.mxu0
    %v1350 = vadd.f32 %v1263, %v1303
    %v1351 = vadd.f32 %v1264, %v1305
    %v1352 = vadd.f32 %v1265, %v1344
    %v1353 = vadd.f32 %v1266, %v1346
    %v1354 = vxor.u32 %v1350, 2147483648
    %v1355 = vxor.u32 %v1351, 2147483648
    %v1356 = vxor.u32 %v1352, 2147483648
    %v1357 = vmul.f32 %v1354, 1.442695
    %v1358 = vpow.pop %v1357
    %v1359 = vmul.f32 %v1355, 1.442695
    %v1360 = vpow.pop %v1359
    %v1361 = vmul.f32 %v1356, 1.442695
    %v1362 = vpow.pop %v1361
    %v1363 = vadd.f32 %v1358, 1.0
    %v1364 = vadd.f32 %v1360, 1.0
    %v1365 = vadd.f32 %v1362, 1.0
    %v1366 = vrcp.pop %v1363
    %v1367 = vmul.f32 1.0, %v1366
    %v1368 = vrcp.pop %v1364
    %v1369 = vmul.f32 1.0, %v1368
    %v1370 = vrcp.pop %v1365
    %v1371 = vmul.f32 1.0, %v1370
    %v1372 = vtanh.pop %v1353
    %v1373 = vmul.f32 %v1369, %v1257
    %v1374 = vmul.f32 %v1367, %v1372
    %v1375 = vadd.f32 %v1373, %v1374
    %v1376 = vtanh.pop %v1375
    %v1377 = vmul.f32 %v1371, %v1376
    %s1378 = smul.u32 6, 4
    %s1379 = smul.addr %s1378, 8
    %s1380 = scalar_lea.vmem [#allocation2], %s1379
    %v1381 = vld [vmem:[%s1380] sm:$0xff]
    %v1382 = vld [vmem:[%s1380 + $0x8] sm:$0xff]
    %v1383 = vld [vmem:[%s1380 + $0x10] sm:$0xff]
    %v1384 = vld [vmem:[%s1380 + $0x18] sm:$0xff]
    %v1385 = vpack.c.bf16 %v1377, %v1377
    %1386 = vmatprep.subr.bf16.mxu0 %v615
    %1387 = vmatpush1.bf16.msra.mxu0 %v614
    %1388 = vmatprep.subr.bf16.mxu0 %v619
    %1389 = vmatpush1.bf16.msra.mxu0 %v618
    %1390 = vmatprep.subr.bf16.mxu0 %v623
    %1391 = vmatpush1.bf16.msra.mxu0 %v622
    %1392 = vmatprep.subr.bf16.mxu0 %v627
    %1393 = vmatpush1.bf16.msra.mxu0 %v626
    %1394 = vmatprep.subr.bf16.mxu0 %v631
    %1395 = vmatpush1.bf16.msra.mxu0 %v630
    %1396 = vmatprep.subr.bf16.mxu0 %v635
    %1397 = vmatpush1.bf16.msra.mxu0 %v634
    %1398 = vmatprep.subr.bf16.mxu0 %v639
    %1399 = vmatpush1.bf16.msra.mxu0 %v638
    %1400 = vmatprep.subr.bf16.mxu0 %v643
    %1401 = vmatpush1.bf16.msra.mxu0 %v642
    %1402 = vmatprep.subr.bf16.mxu0 0
    %1403 = vmatpush1.bf16.msra.mxu0 0
    %1404 = vmatprep.subr.bf16.mxu0 0
    %1405 = vmatpush1.bf16.msra.mxu0 0
    %1406 = vmatprep.subr.bf16.mxu0 0
    %1407 = vmatpush1.bf16.msra.mxu0 0
    %1408 = vmatprep.subr.bf16.mxu0 0
    %1409 = vmatpush1.bf16.msra.mxu0 0
    %1410 = vmatprep.subr.bf16.mxu0 0
    %1411 = vmatpush1.bf16.msra.mxu0 0
    %1412 = vmatprep.subr.bf16.mxu0 0
    %1413 = vmatpush1.bf16.msra.mxu0 0
    %1414 = vmatprep.subr.bf16.mxu0 0
    %1415 = vmatpush1.bf16.msra.mxu0 0
    %1416 = vmatprep.subr.bf16.mxu0 0
    %1417 = vmatpush1.bf16.msra.mxu0 0
    %1418 = vmatprep.mubr.bf16.mxu0 0
    %1419 = vmatmul.mubr.bf16.gmra.mrb[0].mxu0 %v1385
    %v1420 = vpop.f32.mrb[0].mxu0
    %v1421 = vadd.f32 0.0, %v1420
    %v1422 = vpop.f32.mrb[0].mxu0
    %v1423 = vadd.f32 0.0, %v1422
    %v1424 = vpop.f32.mrb[0].mxu0
    %v1425 = vpop.f32.mrb[0].mxu0
    %1426 = vdwg.mxu0
    %1427 = vmatprep.subr.bf16.mxu0 %v617
    %1428 = vmatpush1.bf16.msra.mxu0 %v616
    %1429 = vmatprep.subr.bf16.mxu0 %v621
    %1430 = vmatpush1.bf16.msra.mxu0 %v620
    %1431 = vmatprep.subr.bf16.mxu0 %v625
    %1432 = vmatpush1.bf16.msra.mxu0 %v624
    %1433 = vmatprep.subr.bf16.mxu0 %v629
    %1434 = vmatpush1.bf16.msra.mxu0 %v628
    %1435 = vmatprep.subr.bf16.mxu0 %v633
    %1436 = vmatpush1.bf16.msra.mxu0 %v632
    %1437 = vmatprep.subr.bf16.mxu0 %v637
    %1438 = vmatpush1.bf16.msra.mxu0 %v636
    %1439 = vmatprep.subr.bf16.mxu0 %v641
    %1440 = vmatpush1.bf16.msra.mxu0 %v640
    %1441 = vmatprep.subr.bf16.mxu0 %v645
    %1442 = vmatpush1.bf16.msra.mxu0 %v644
    %1443 = vmatprep.subr.bf16.mxu0 0
    %1444 = vmatpush1.bf16.msra.mxu0 0
    %1445 = vmatprep.subr.bf16.mxu0 0
    %1446 = vmatpush1.bf16.msra.mxu0 0
    %1447 = vmatprep.subr.bf16.mxu0 0
    %1448 = vmatpush1.bf16.msra.mxu0 0
    %1449 = vmatprep.subr.bf16.mxu0 0
    %1450 = vmatpush1.bf16.msra.mxu0 0
    %1451 = vmatprep.subr.bf16.mxu0 0
    %1452 = vmatpush1.bf16.msra.mxu0 0
    %1453 = vmatprep.subr.bf16.mxu0 0
    %1454 = vmatpush1.bf16.msra.mxu0 0
    %1455 = vmatprep.subr.bf16.mxu0 0
    %1456 = vmatpush1.bf16.msra.mxu0 0
    %1457 = vmatprep.subr.bf16.mxu0 0
    %1458 = vmatpush1.bf16.msra.mxu0 0
    %1459 = vmatprep.mubr.bf16.mxu0 0
    %1460 = vmatmul.mubr.bf16.gmra.mrb[0].mxu0 %v1385
    %v1461 = vpop.f32.mrb[0].mxu0
    %v1462 = vadd.f32 0.0, %v1461
    %v1463 = vpop.f32.mrb[0].mxu0
    %v1464 = vadd.f32 0.0, %v1463
    %v1465 = vpop.f32.mrb[0].mxu0
    %v1466 = vpop.f32.mrb[0].mxu0
    %1467 = vdwg.mxu0
    %v1468 = vadd.f32 %v1381, %v1421
    %v1469 = vadd.f32 %v1382, %v1423
    %v1470 = vadd.f32 %v1383, %v1462
    %v1471 = vadd.f32 %v1384, %v1464
    %v1472 = vxor.u32 %v1468, 2147483648
    %v1473 = vxor.u32 %v1469, 2147483648
    %v1474 = vxor.u32 %v1470, 2147483648
    %v1475 = vmul.f32 %v1472, 1.442695
    %v1476 = vpow.pop %v1475
    %v1477 = vmul.f32 %v1473, 1.442695
    %v1478 = vpow.pop %v1477
    %v1479 = vmul.f32 %v1474, 1.442695
    %v1480 = vpow.pop %v1479
    %v1481 = vadd.f32 %v1476, 1.0
    %v1482 = vadd.f32 %v1478, 1.0
    %v1483 = vadd.f32 %v1480, 1.0
    %v1484 = vrcp.pop %v1481
    %v1485 = vmul.f32 1.0, %v1484
    %v1486 = vrcp.pop %v1482
    %v1487 = vmul.f32 1.0, %v1486
    %v1488 = vrcp.pop %v1483
    %v1489 = vmul.f32 1.0, %v1488
    %v1490 = vtanh.pop %v1471
    %v1491 = vmul.f32 %v1487, %v1375
    %v1492 = vmul.f32 %v1485, %v1490
    %v1493 = vadd.f32 %v1491, %v1492
    %v1494 = vtanh.pop %v1493
    %v1495 = vmul.f32 %v1489, %v1494
    %s1496 = smul.u32 7, 4
    %s1497 = smul.addr %s1496, 8
    %s1498 = scalar_lea.vmem [#allocation2], %s1497
    %v1499 = vld [vmem:[%s1498] sm:$0xff]
    %v1500 = vld [vmem:[%s1498 + $0x8] sm:$0xff]
    %v1501 = vld [vmem:[%s1498 + $0x10] sm:$0xff]
    %v1502 = vld [vmem:[%s1498 + $0x18] sm:$0xff]
    %v1503 = vpack.c.bf16 %v1495, %v1495
    %1504 = vmatprep.subr.bf16.mxu0 %v615
    %1505 = vmatpush1.bf16.msra.mxu0 %v614
    %1506 = vmatprep.subr.bf16.mxu0 %v619
    %1507 = vmatpush1.bf16.msra.mxu0 %v618
    %1508 = vmatprep.subr.bf16.mxu0 %v623
    %1509 = vmatpush1.bf16.msra.mxu0 %v622
    %1510 = vmatprep.subr.bf16.mxu0 %v627
    %1511 = vmatpush1.bf16.msra.mxu0 %v626
    %1512 = vmatprep.subr.bf16.mxu0 %v631
    %1513 = vmatpush1.bf16.msra.mxu0 %v630
    %1514 = vmatprep.subr.bf16.mxu0 %v635
    %1515 = vmatpush1.bf16.msra.mxu0 %v634
    %1516 = vmatprep.subr.bf16.mxu0 %v639
    %1517 = vmatpush1.bf16.msra.mxu0 %v638
    %1518 = vmatprep.subr.bf16.mxu0 %v643
    %1519 = vmatpush1.bf16.msra.mxu0 %v642
    %1520 = vmatprep.subr.bf16.mxu0 0
    %1521 = vmatpush1.bf16.msra.mxu0 0
    %1522 = vmatprep.subr.bf16.mxu0 0
    %1523 = vmatpush1.bf16.msra.mxu0 0
    %1524 = vmatprep.subr.bf16.mxu0 0
    %1525 = vmatpush1.bf16.msra.mxu0 0
    %1526 = vmatprep.subr.bf16.mxu0 0
    %1527 = vmatpush1.bf16.msra.mxu0 0
    %1528 = vmatprep.subr.bf16.mxu0 0
    %1529 = vmatpush1.bf16.msra.mxu0 0
    %1530 = vmatprep.subr.bf16.mxu0 0
    %1531 = vmatpush1.bf16.msra.mxu0 0
    %1532 = vmatprep.subr.bf16.mxu0 0
    %1533 = vmatpush1.bf16.msra.mxu0 0
    %1534 = vmatprep.subr.bf16.mxu0 0
    %1535 = vmatpush1.bf16.msra.mxu0 0
    %1536 = vmatprep.mubr.bf16.mxu0 0
    %1537 = vmatmul.mubr.bf16.gmra.mrb[0].mxu0 %v1503
    %v1538 = vpop.f32.mrb[0].mxu0
    %v1539 = vadd.f32 0.0, %v1538
    %v1540 = vpop.f32.mrb[0].mxu0
    %v1541 = vadd.f32 0.0, %v1540
    %v1542 = vpop.f32.mrb[0].mxu0
    %v1543 = vpop.f32.mrb[0].mxu0
    %1544 = vdwg.mxu0
    %1545 = vmatprep.subr.bf16.mxu0 %v617
    %1546 = vmatpush1.bf16.msra.mxu0 %v616
    %1547 = vmatprep.subr.bf16.mxu0 %v621
    %1548 = vmatpush1.bf16.msra.mxu0 %v620
    %1549 = vmatprep.subr.bf16.mxu0 %v625
    %1550 = vmatpush1.bf16.msra.mxu0 %v624
    %1551 = vmatprep.subr.bf16.mxu0 %v629
    %1552 = vmatpush1.bf16.msra.mxu0 %v628
    %1553 = vmatprep.subr.bf16.mxu0 %v633
    %1554 = vmatpush1.bf16.msra.mxu0 %v632
    %1555 = vmatprep.subr.bf16.mxu0 %v637
    %1556 = vmatpush1.bf16.msra.mxu0 %v636
    %1557 = vmatprep.subr.bf16.mxu0 %v641
    %1558 = vmatpush1.bf16.msra.mxu0 %v640
    %1559 = vmatprep.subr.bf16.mxu0 %v645
    %1560 = vmatpush1.bf16.msra.mxu0 %v644
    %1561 = vmatprep.subr.bf16.mxu0 0
    %1562 = vmatpush1.bf16.msra.mxu0 0
    %1563 = vmatprep.subr.bf16.mxu0 0
    %1564 = vmatpush1.bf16.msra.mxu0 0
    %1565 = vmatprep.subr.bf16.mxu0 0
    %1566 = vmatpush1.bf16.msra.mxu0 0
    %1567 = vmatprep.subr.bf16.mxu0 0
    %1568 = vmatpush1.bf16.msra.mxu0 0
    %1569 = vmatprep.subr.bf16.mxu0 0
    %1570 = vmatpush1.bf16.msra.mxu0 0
    %1571 = vmatprep.subr.bf16.mxu0 0
    %1572 = vmatpush1.bf16.msra.mxu0 0
    %1573 = vmatprep.subr.bf16.mxu0 0
    %1574 = vmatpush1.bf16.msra.mxu0 0
    %1575 = vmatprep.subr.bf16.mxu0 0
    %1576 = vmatpush1.bf16.msra.mxu0 0
    %1577 = vmatprep.mubr.bf16.mxu0 0
    %1578 = vmatmul.mubr.bf16.gmra.mrb[0].mxu0 %v1503
    %v1579 = vpop.f32.mrb[0].mxu0
    %v1580 = vadd.f32 0.0, %v1579
    %v1581 = vpop.f32.mrb[0].mxu0
    %v1582 = vadd.f32 0.0, %v1581
    %v1583 = vpop.f32.mrb[0].mxu0
    %v1584 = vpop.f32.mrb[0].mxu0
    %1585 = vdwg.mxu0
    %v1586 = vadd.f32 %v1499, %v1539
    %v1587 = vadd.f32 %v1500, %v1541
    %v1588 = vadd.f32 %v1501, %v1580
    %v1589 = vadd.f32 %v1502, %v1582
    %v1590 = vxor.u32 %v1586, 2147483648
    %v1591 = vxor.u32 %v1587, 2147483648
    %v1592 = vxor.u32 %v1588, 2147483648
    %v1593 = vmul.f32 %v1590, 1.442695
    %v1594 = vpow.pop %v1593
    %v1595 = vmul.f32 %v1591, 1.442695
    %v1596 = vpow.pop %v1595
    %v1597 = vmul.f32 %v1592, 1.442695
    %v1598 = vpow.pop %v1597
    %v1599 = vadd.f32 %v1594, 1.0
    %v1600 = vadd.f32 %v1596, 1.0
    %v1601 = vadd.f32 %v1598, 1.0
    %v1602 = vrcp.pop %v1599
    %v1603 = vmul.f32 1.0, %v1602
    %v1604 = vrcp.pop %v1600
    %v1605 = vmul.f32 1.0, %v1604
    %v1606 = vrcp.pop %v1601
    %v1607 = vmul.f32 1.0, %v1606
    %v1608 = vtanh.pop %v1589
    %v1609 = vmul.f32 %v1605, %v1493
    %v1610 = vmul.f32 %v1603, %v1608
    %v1611 = vadd.f32 %v1609, %v1610
    %v1612 = vtanh.pop %v1611
    %v1613 = vmul.f32 %v1607, %v1612
    %1614 = vst [vmem:[%s4] sm:$0xff] %v1613
    %1615 = vst [vmem:[#allocation3] sm:$0xff] %v1611
    // Predicated region
    $region30: #{lstm_last_hidden.1} parent=1 // pred_check
      _
    $region31: #{lstm_last_hidden.1} parent=1 // pred_check_branch
      %1617 = sbr.rel (0) target = $region33
    $region32: #{lstm_last_hidden.1} parent=1 // pred_region
      _
    $region33: #{lstm_last_hidden.1} parent=1 // pred_fallthru
      _
    // Predicated region
    $region34: #{lstm_last_hidden.1} parent=1 // pred_check
      _
    $region35: #{lstm_last_hidden.1} parent=1 // pred_check_branch
      %1619 = sbr.rel (0) target = $region37
    $region36: #{lstm_last_hidden.1} parent=1 // pred_region
      _
    $region37: #{lstm_last_hidden.1} parent=1 // pred_fallthru
      _
    %1620 = vsyncpa [#allocation5], 1
    %1621 = vsyncpa [#allocation7], 1

</llo_original>
